<compile_context>
chip_gen: v7x
topology: tpu7x:2x2x1
jax: 0.10.0
libtpu: 0.0.40
codegen_flags: <defaults>
</compile_context>

<pallas_src>
import functools

import jax
import jax.numpy as jnp
import numpy as np
from jax.experimental import pallas as pl
from jax.experimental.pallas import tpu as pltpu


def _round_up(x, m):
    return (x + m - 1) // m * m


def _decoder_rnn_kernel(x_ref, wih_ref, whh_ref, b_ref, fcw_ref, fcb_ref,
                        out_ref, xg_ref, hall_ref, *, T, B, H):
    """x_ref: (T*B, E) time-major flattened inputs; out_ref: (T*B, V) logits."""
    # ---- Stage 1: batched input projection for all timesteps (one MXU matmul,
    # bias folded in so there is no per-step broadcast add on the serial path).
    xg_ref[...] = (
        jnp.dot(x_ref[...], wih_ref[...], preferred_element_type=jnp.float32)
        + b_ref[...]
    )

    # Hoist the recurrent weight load out of the loop.
    whh = whh_ref[...]

    # ---- Stage 2: serial LSTM recurrence. h/c live in the fori_loop carry.
    def step(t, carry):
        h, c = carry
        row = pl.multiple_of(t * B, B)  # B is a multiple of 8 (sublane aligned)
        gates = xg_ref[pl.ds(row, B), :] + jnp.dot(
            h, whh, preferred_element_type=jnp.float32)
        # PyTorch gate ordering: input, forget, cell(g), output.
        i_g = jax.nn.sigmoid(gates[:, 0:H])
        f_g = jax.nn.sigmoid(gates[:, H:2 * H])
        g_g = jnp.tanh(gates[:, 2 * H:3 * H])
        o_g = jax.nn.sigmoid(gates[:, 3 * H:4 * H])
        c = f_g * c + i_g * g_g
        h = o_g * jnp.tanh(c)
        hall_ref[pl.ds(row, B), :] = h
        return (h, c)

    # PyTorch nn.LSTM defaults to zero initial (h0, c0) in forward().
    h0 = jnp.zeros((B, H), jnp.float32)
    c0 = jnp.zeros((B, H), jnp.float32)
    jax.lax.fori_loop(0, T, step, (h0, c0), unroll=True)

    # ---- Stage 3: batched FC vocab projection over all timesteps at once.
    out_ref[...] = (
        jnp.dot(hall_ref[...], fcw_ref[...], preferred_element_type=jnp.float32)
        + fcb_ref[...]
    ).astype(out_ref.dtype)


def decoder_rnn_forward(features, captions, params):
    """features: (B, E) f32, captions: (B, T_cap) int32 -> logits (B, T, V)."""
    emb_table = params["embedding"]          # (V, E)
    w_ih = params["w_ih"]                    # (E, 4H)  (transposed torch weight_ih)
    w_hh = params["w_hh"]                    # (H, 4H)  (transposed torch weight_hh)
    b = params["b"]                          # (1, 4H)  (b_ih + b_hh)
    fc_w = params["fc_w"]                    # (H, V)   (transposed torch fc.weight)
    fc_b = params["fc_b"]                    # (1, V)

    B, E = features.shape
    H = w_hh.shape[0]
    V = fc_w.shape[1]

    # Glue: embedding lookup on captions[:, :-1] and concat features as t=0.
    emb = jnp.take(emb_table, captions[:, :-1], axis=0)        # (B, T_cap-1, E)
    x = jnp.concatenate([features[:, None, :], emb], axis=1)   # (B, T, E)
    T = x.shape[1]

    # Alignment: pad batch to 8 sublanes, vocab to 128 lanes.
    Bp = _round_up(max(B, 8), 8)
    Vp = _round_up(V, 128)
    x = jnp.pad(x, ((0, Bp - B), (0, 0), (0, 0))).astype(jnp.float32)
    fc_w_p = jnp.pad(fc_w, ((0, 0), (0, Vp - V)))
    fc_b_p = jnp.pad(fc_b, ((0, 0), (0, Vp - V)))

    # Time-major, flattened: row index = t*Bp + b.
    x_flat = jnp.transpose(x, (1, 0, 2)).reshape(T * Bp, E)

    kernel = functools.partial(_decoder_rnn_kernel, T=T, B=Bp, H=H)

    out_flat = pl.pallas_call(
        kernel,
        out_shape=jax.ShapeDtypeStruct((T * Bp, Vp), jnp.float32),
        grid_spec=pltpu.PrefetchScalarGridSpec(
            num_scalar_prefetch=0,
            grid=(1,),
            in_specs=[
                pl.BlockSpec((T * Bp, E), lambda i: (0, 0)),
                pl.BlockSpec((E, 4 * H), lambda i: (0, 0)),
                pl.BlockSpec((H, 4 * H), lambda i: (0, 0)),
                pl.BlockSpec((1, 4 * H), lambda i: (0, 0)),
                pl.BlockSpec((H, Vp), lambda i: (0, 0)),
                pl.BlockSpec((1, Vp), lambda i: (0, 0)),
            ],
            out_specs=pl.BlockSpec((T * Bp, Vp), lambda i: (0, 0)),
            scratch_shapes=[
                pltpu.VMEM((T * Bp, 4 * H), jnp.float32),  # precomputed x@W_ih+b
                pltpu.VMEM((T * Bp, H), jnp.float32),      # all hidden states
            ],
        ),
        compiler_params=pltpu.CompilerParams(
            dimension_semantics=("arbitrary",)),
    )(x_flat, w_ih, w_hh, b, fc_w_p, fc_b_p)

    out = out_flat.reshape(T, Bp, Vp)[:, :B, :V]     # strip padding
    return jnp.transpose(out, (1, 0, 2))             # (B, T, V)


def _reference_forward(features, captions, params):
    """Pure-JAX reference replicating the PyTorch semantics."""
    emb = jnp.take(params["embedding"], captions[:, :-1], axis=0)
    x = jnp.concatenate([features[:, None, :], emb], axis=1)   # (B, T, E)
    B = x.shape[0]
    H = params["w_hh"].shape[0]

    def step(carry, x_t):
        h, c = carry
        gates = x_t @ params["w_ih"] + h @ params["w_hh"] + params["b"]
        i = jax.nn.sigmoid(gates[:, 0:H])
        f = jax.nn.sigmoid(gates[:, H:2 * H])
        g = jnp.tanh(gates[:, 2 * H:3 * H])
        o = jax.nn.sigmoid(gates[:, 3 * H:4 * H])
        c = f * c + i * g
        h = o * jnp.tanh(c)
        return (h, c), h

    h0 = jnp.zeros((B, H), jnp.float32)
    c0 = jnp.zeros((B, H), jnp.float32)
    _, hs = jax.lax.scan(step, (h0, c0), jnp.transpose(x, (1, 0, 2)))
    hs = jnp.transpose(hs, (1, 0, 2))                          # (B, T, H)
    return hs @ params["fc_w"] + params["fc_b"]


def init_params(key, embed_size, hidden_size, vocab_size):
    ks = jax.random.split(key, 7)
    scale = 0.1
    return {
        "embedding": scale * jax.random.normal(ks[0], (vocab_size, embed_size), jnp.float32),
        "w_ih": scale * jax.random.normal(ks[1], (embed_size, 4 * hidden_size), jnp.float32),
        "w_hh": scale * jax.random.normal(ks[2], (hidden_size, 4 * hidden_size), jnp.float32),
        "b": (scale * jax.random.normal(ks[3], (1, 4 * hidden_size), jnp.float32)
              + scale * jax.random.normal(ks[4], (1, 4 * hidden_size), jnp.float32)),
        "fc_w": scale * jax.random.normal(ks[5], (hidden_size, vocab_size), jnp.float32),
        "fc_b": scale * jax.random.normal(ks[6], (1, vocab_size), jnp.float32),
    }


if __name__ == "__main__":
    embed_size = 32
    hidden_size = 32
    vocab_size = 128
    batch = 2
    cap_len = 8   # LSTM sequence length = cap_len (feature + cap_len-1 tokens)

    key = jax.random.PRNGKey(0)
    k_feat, k_cap, k_par = jax.random.split(key, 3)

    params = init_params(k_par, embed_size, hidden_size, vocab_size)
    features = jax.random.normal(k_feat, (batch, embed_size), jnp.float32)
    captions = jax.random.randint(k_cap, (batch, cap_len), 0, vocab_size, jnp.int32)

    logits = decoder_rnn_forward(features, captions, params)
    logits = jax.block_until_ready(logits)

    ref = jax.block_until_ready(_reference_forward(features, captions, params))
    assert logits.shape == (batch, cap_len, vocab_size)
    assert np.allclose(np.asarray(logits), np.asarray(ref), rtol=1e-3, atol=1e-3)

    print("KERNEL_OK")
</pallas_src>

<mosaic_0001>
module attributes {stable_mosaic.version = 11 : i64} {
  func.func @_decoder_rnn_kernel(%arg0: i32, %arg1: memref<64x32xf32, #tpu.memory_space<vmem>>, %arg2: memref<32x128xf32, #tpu.memory_space<vmem>>, %arg3: memref<32x128xf32, #tpu.memory_space<vmem>>, %arg4: memref<1x128xf32, #tpu.memory_space<vmem>>, %arg5: memref<32x128xf32, #tpu.memory_space<vmem>>, %arg6: memref<1x128xf32, #tpu.memory_space<vmem>>, %arg7: memref<64x128xf32, #tpu.memory_space<vmem>>, %arg8: memref<64x128xf32, #tpu.memory_space<vmem>>, %arg9: memref<64x32xf32, #tpu.memory_space<vmem>>) attributes {dimension_semantics = [#tpu.dimension_semantics<arbitrary>], iteration_bounds = array<i64: 1>, scalar_prefetch = 0 : i64, scratch_operands = 2 : i64, tpu.core_type = #tpu.core_type<tc>, window_params = [{pipeline_mode = #tpu.pipeline_mode<synchronous>, transform_indices = @transform_0, window_bounds = array<i64: 64, 32>}, {pipeline_mode = #tpu.pipeline_mode<synchronous>, transform_indices = @transform_1, window_bounds = array<i64: 32, 128>}, {pipeline_mode = #tpu.pipeline_mode<synchronous>, transform_indices = @transform_2, window_bounds = array<i64: 32, 128>}, {pipeline_mode = #tpu.pipeline_mode<synchronous>, transform_indices = @transform_3, window_bounds = array<i64: 1, 128>}, {pipeline_mode = #tpu.pipeline_mode<synchronous>, transform_indices = @transform_4, window_bounds = array<i64: 32, 128>}, {pipeline_mode = #tpu.pipeline_mode<synchronous>, transform_indices = @transform_5, window_bounds = array<i64: 1, 128>}, {pipeline_mode = #tpu.pipeline_mode<synchronous>, transform_indices = @transform_6, window_bounds = array<i64: 64, 128>}]} {
    %c0 = arith.constant 0 : index
    %c0_0 = arith.constant 0 : index
    %0 = vector.load %arg1[%c0, %c0_0] : memref<64x32xf32, #tpu.memory_space<vmem>>, vector<64x32xf32>
    %c0_1 = arith.constant 0 : index
    %c0_2 = arith.constant 0 : index
    %1 = vector.load %arg2[%c0_1, %c0_2] : memref<32x128xf32, #tpu.memory_space<vmem>>, vector<32x128xf32>
    %cst = arith.constant dense<0.000000e+00> : vector<64x128xf32>
    %2 = tpu.matmul %0, %1, %cst {dimension_numbers = #tpu.dot_dimension_numbers<[1], [0], [0], [1], [0, 0, 1, 1], [], []>} : vector<64x32xf32>, vector<32x128xf32>, vector<64x128xf32> -> vector<64x128xf32>
    %c0_3 = arith.constant 0 : index
    %c0_4 = arith.constant 0 : index
    %3 = vector.load %arg4[%c0_3, %c0_4] : memref<1x128xf32, #tpu.memory_space<vmem>>, vector<1x128xf32>
    %4 = vector.broadcast %3 : vector<1x128xf32> to vector<64x128xf32>
    %5 = arith.addf %2, %4 : vector<64x128xf32>
    %c0_5 = arith.constant 0 : index
    %c0_6 = arith.constant 0 : index
    %6 = vector.load %arg8[%c0_5, %c0_6] : memref<64x128xf32, #tpu.memory_space<vmem>>, vector<64x128xf32>
    tpu.vector_store %arg8[%c0_5, %c0_6], %5 {strides = array<i32>} : memref<64x128xf32, #tpu.memory_space<vmem>>, vector<64x128xf32>,
    %c0_7 = arith.constant 0 : index
    %c0_8 = arith.constant 0 : index
    %7 = vector.load %arg3[%c0_7, %c0_8] : memref<32x128xf32, #tpu.memory_space<vmem>>, vector<32x128xf32>
    %cst_9 = arith.constant 0.000000e+00 : f32
    %8 = vector.broadcast %cst_9 : f32 to vector<8x32xf32>
    %cst_10 = arith.constant 0.000000e+00 : f32
    %9 = vector.broadcast %cst_10 : f32 to vector<8x32xf32>
    %c0_i32 = arith.constant 0 : i32
    %c8_i32 = arith.constant 8 : i32
    %10 = arith.muli %c0_i32, %c8_i32 : i32
    %11 = tpu.assume_multiple %10, 8 : i32
    %12 = arith.index_cast %11 : i32 to index
    %c0_11 = arith.constant 0 : index
    %13 = vector.load %arg8[%12, %c0_11] : memref<64x128xf32, #tpu.memory_space<vmem>>, vector<8x128xf32>
    %cst_12 = arith.constant dense<0.000000e+00> : vector<8x128xf32>
    %14 = tpu.matmul %8, %7, %cst_12 {dimension_numbers = #tpu.dot_dimension_numbers<[1], [0], [0], [1], [0, 0, 1, 1], [], []>} : vector<8x32xf32>, vector<32x128xf32>, vector<8x128xf32> -> vector<8x128xf32>
    %15 = arith.addf %13, %14 : vector<8x128xf32>
    %16 = vector.extract_strided_slice %15 {offsets = [0, 0], sizes = [8, 32], strides = [1, 1]} : vector<8x128xf32> to vector<8x32xf32>
    %17 = arith.negf %16 : vector<8x32xf32>
    %18 = math.exp %17 : vector<8x32xf32>
    %cst_13 = arith.constant 1.000000e+00 : f32
    %19 = vector.broadcast %cst_13 : f32 to vector<8x32xf32>
    %20 = arith.addf %19, %18 : vector<8x32xf32>
    %21 = arith.divf %19, %20 : vector<8x32xf32>
    %22 = vector.extract_strided_slice %15 {offsets = [0, 32], sizes = [8, 32], strides = [1, 1]} : vector<8x128xf32> to vector<8x32xf32>
    %23 = arith.negf %22 : vector<8x32xf32>
    %24 = math.exp %23 : vector<8x32xf32>
    %cst_14 = arith.constant 1.000000e+00 : f32
    %25 = vector.broadcast %cst_14 : f32 to vector<8x32xf32>
    %26 = arith.addf %25, %24 : vector<8x32xf32>
    %27 = arith.divf %25, %26 : vector<8x32xf32>
    %28 = vector.extract_strided_slice %15 {offsets = [0, 64], sizes = [8, 32], strides = [1, 1]} : vector<8x128xf32> to vector<8x32xf32>
    %29 = math.tanh %28 : vector<8x32xf32>
    %30 = vector.extract_strided_slice %15 {offsets = [0, 96], sizes = [8, 32], strides = [1, 1]} : vector<8x128xf32> to vector<8x32xf32>
    %31 = arith.negf %30 : vector<8x32xf32>
    %32 = math.exp %31 : vector<8x32xf32>
    %cst_15 = arith.constant 1.000000e+00 : f32
    %33 = vector.broadcast %cst_15 : f32 to vector<8x32xf32>
    %34 = arith.addf %33, %32 : vector<8x32xf32>
    %35 = arith.divf %33, %34 : vector<8x32xf32>
    %36 = arith.mulf %27, %9 : vector<8x32xf32>
    %37 = arith.mulf %21, %29 : vector<8x32xf32>
    %38 = arith.addf %36, %37 : vector<8x32xf32>
    %39 = math.tanh %38 : vector<8x32xf32>
    %40 = arith.mulf %35, %39 : vector<8x32xf32>
    %41 = arith.index_cast %11 : i32 to index
    %c0_16 = arith.constant 0 : index
    %42 = vector.load %arg9[%41, %c0_16] : memref<64x32xf32, #tpu.memory_space<vmem>>, vector<8x32xf32>
    tpu.vector_store %arg9[%41, %c0_16], %40 {strides = array<i32>} : memref<64x32xf32, #tpu.memory_space<vmem>>, vector<8x32xf32>,
    %c1_i32 = arith.constant 1 : i32
    %c8_i32_17 = arith.constant 8 : i32
    %43 = arith.muli %c1_i32, %c8_i32_17 : i32
    %44 = tpu.assume_multiple %43, 8 : i32
    %45 = arith.index_cast %44 : i32 to index
    %c0_18 = arith.constant 0 : index
    %46 = vector.load %arg8[%45, %c0_18] : memref<64x128xf32, #tpu.memory_space<vmem>>, vector<8x128xf32>
    %cst_19 = arith.constant dense<0.000000e+00> : vector<8x128xf32>
    %47 = tpu.matmul %40, %7, %cst_19 {dimension_numbers = #tpu.dot_dimension_numbers<[1], [0], [0], [1], [0, 0, 1, 1], [], []>} : vector<8x32xf32>, vector<32x128xf32>, vector<8x128xf32> -> vector<8x128xf32>
    %48 = arith.addf %46, %47 : vector<8x128xf32>
    %49 = vector.extract_strided_slice %48 {offsets = [0, 0], sizes = [8, 32], strides = [1, 1]} : vector<8x128xf32> to vector<8x32xf32>
    %50 = arith.negf %49 : vector<8x32xf32>
    %51 = math.exp %50 : vector<8x32xf32>
    %cst_20 = arith.constant 1.000000e+00 : f32
    %52 = vector.broadcast %cst_20 : f32 to vector<8x32xf32>
    %53 = arith.addf %52, %51 : vector<8x32xf32>
    %54 = arith.divf %52, %53 : vector<8x32xf32>
    %55 = vector.extract_strided_slice %48 {offsets = [0, 32], sizes = [8, 32], strides = [1, 1]} : vector<8x128xf32> to vector<8x32xf32>
    %56 = arith.negf %55 : vector<8x32xf32>
    %57 = math.exp %56 : vector<8x32xf32>
    %cst_21 = arith.constant 1.000000e+00 : f32
    %58 = vector.broadcast %cst_21 : f32 to vector<8x32xf32>
    %59 = arith.addf %58, %57 : vector<8x32xf32>
    %60 = arith.divf %58, %59 : vector<8x32xf32>
    %61 = vector.extract_strided_slice %48 {offsets = [0, 64], sizes = [8, 32], strides = [1, 1]} : vector<8x128xf32> to vector<8x32xf32>
    %62 = math.tanh %61 : vector<8x32xf32>
    %63 = vector.extract_strided_slice %48 {offsets = [0, 96], sizes = [8, 32], strides = [1, 1]} : vector<8x128xf32> to vector<8x32xf32>
    %64 = arith.negf %63 : vector<8x32xf32>
    %65 = math.exp %64 : vector<8x32xf32>
    %cst_22 = arith.constant 1.000000e+00 : f32
    %66 = vector.broadcast %cst_22 : f32 to vector<8x32xf32>
    %67 = arith.addf %66, %65 : vector<8x32xf32>
    %68 = arith.divf %66, %67 : vector<8x32xf32>
    %69 = arith.mulf %60, %38 : vector<8x32xf32>
    %70 = arith.mulf %54, %62 : vector<8x32xf32>
    %71 = arith.addf %69, %70 : vector<8x32xf32>
    %72 = math.tanh %71 : vector<8x32xf32>
    %73 = arith.mulf %68, %72 : vector<8x32xf32>
    %74 = arith.index_cast %44 : i32 to index
    %c0_23 = arith.constant 0 : index
    %75 = vector.load %arg9[%74, %c0_23] : memref<64x32xf32, #tpu.memory_space<vmem>>, vector<8x32xf32>
    tpu.vector_store %arg9[%74, %c0_23], %73 {strides = array<i32>} : memref<64x32xf32, #tpu.memory_space<vmem>>, vector<8x32xf32>,
    %c2_i32 = arith.constant 2 : i32
    %c8_i32_24 = arith.constant 8 : i32
    %76 = arith.muli %c2_i32, %c8_i32_24 : i32
    %77 = tpu.assume_multiple %76, 8 : i32
    %78 = arith.index_cast %77 : i32 to index
    %c0_25 = arith.constant 0 : index
    %79 = vector.load %arg8[%78, %c0_25] : memref<64x128xf32, #tpu.memory_space<vmem>>, vector<8x128xf32>
    %cst_26 = arith.constant dense<0.000000e+00> : vector<8x128xf32>
    %80 = tpu.matmul %73, %7, %cst_26 {dimension_numbers = #tpu.dot_dimension_numbers<[1], [0], [0], [1], [0, 0, 1, 1], [], []>} : vector<8x32xf32>, vector<32x128xf32>, vector<8x128xf32> -> vector<8x128xf32>
    %81 = arith.addf %79, %80 : vector<8x128xf32>
    %82 = vector.extract_strided_slice %81 {offsets = [0, 0], sizes = [8, 32], strides = [1, 1]} : vector<8x128xf32> to vector<8x32xf32>
    %83 = arith.negf %82 : vector<8x32xf32>
    %84 = math.exp %83 : vector<8x32xf32>
    %cst_27 = arith.constant 1.000000e+00 : f32
    %85 = vector.broadcast %cst_27 : f32 to vector<8x32xf32>
    %86 = arith.addf %85, %84 : vector<8x32xf32>
    %87 = arith.divf %85, %86 : vector<8x32xf32>
    %88 = vector.extract_strided_slice %81 {offsets = [0, 32], sizes = [8, 32], strides = [1, 1]} : vector<8x128xf32> to vector<8x32xf32>
    %89 = arith.negf %88 : vector<8x32xf32>
    %90 = math.exp %89 : vector<8x32xf32>
    %cst_28 = arith.constant 1.000000e+00 : f32
    %91 = vector.broadcast %cst_28 : f32 to vector<8x32xf32>
    %92 = arith.addf %91, %90 : vector<8x32xf32>
    %93 = arith.divf %91, %92 : vector<8x32xf32>
    %94 = vector.extract_strided_slice %81 {offsets = [0, 64], sizes = [8, 32], strides = [1, 1]} : vector<8x128xf32> to vector<8x32xf32>
    %95 = math.tanh %94 : vector<8x32xf32>
    %96 = vector.extract_strided_slice %81 {offsets = [0, 96], sizes = [8, 32], strides = [1, 1]} : vector<8x128xf32> to vector<8x32xf32>
    %97 = arith.negf %96 : vector<8x32xf32>
    %98 = math.exp %97 : vector<8x32xf32>
    %cst_29 = arith.constant 1.000000e+00 : f32
    %99 = vector.broadcast %cst_29 : f32 to vector<8x32xf32>
    %100 = arith.addf %99, %98 : vector<8x32xf32>
    %101 = arith.divf %99, %100 : vector<8x32xf32>
    %102 = arith.mulf %93, %71 : vector<8x32xf32>
    %103 = arith.mulf %87, %95 : vector<8x32xf32>
    %104 = arith.addf %102, %103 : vector<8x32xf32>
    %105 = math.tanh %104 : vector<8x32xf32>
    %106 = arith.mulf %101, %105 : vector<8x32xf32>
    %107 = arith.index_cast %77 : i32 to index
    %c0_30 = arith.constant 0 : index
    %108 = vector.load %arg9[%107, %c0_30] : memref<64x32xf32, #tpu.memory_space<vmem>>, vector<8x32xf32>
    tpu.vector_store %arg9[%107, %c0_30], %106 {strides = array<i32>} : memref<64x32xf32, #tpu.memory_space<vmem>>, vector<8x32xf32>,
    %c3_i32 = arith.constant 3 : i32
    %c8_i32_31 = arith.constant 8 : i32
    %109 = arith.muli %c3_i32, %c8_i32_31 : i32
    %110 = tpu.assume_multiple %109, 8 : i32
    %111 = arith.index_cast %110 : i32 to index
    %c0_32 = arith.constant 0 : index
    %112 = vector.load %arg8[%111, %c0_32] : memref<64x128xf32, #tpu.memory_space<vmem>>, vector<8x128xf32>
    %cst_33 = arith.constant dense<0.000000e+00> : vector<8x128xf32>
    %113 = tpu.matmul %106, %7, %cst_33 {dimension_numbers = #tpu.dot_dimension_numbers<[1], [0], [0], [1], [0, 0, 1, 1], [], []>} : vector<8x32xf32>, vector<32x128xf32>, vector<8x128xf32> -> vector<8x128xf32>
    %114 = arith.addf %112, %113 : vector<8x128xf32>
    %115 = vector.extract_strided_slice %114 {offsets = [0, 0], sizes = [8, 32], strides = [1, 1]} : vector<8x128xf32> to vector<8x32xf32>
    %116 = arith.negf %115 : vector<8x32xf32>
    %117 = math.exp %116 : vector<8x32xf32>
    %cst_34 = arith.constant 1.000000e+00 : f32
    %118 = vector.broadcast %cst_34 : f32 to vector<8x32xf32>
    %119 = arith.addf %118, %117 : vector<8x32xf32>
    %120 = arith.divf %118, %119 : vector<8x32xf32>
    %121 = vector.extract_strided_slice %114 {offsets = [0, 32], sizes = [8, 32], strides = [1, 1]} : vector<8x128xf32> to vector<8x32xf32>
    %122 = arith.negf %121 : vector<8x32xf32>
    %123 = math.exp %122 : vector<8x32xf32>
    %cst_35 = arith.constant 1.000000e+00 : f32
    %124 = vector.broadcast %cst_35 : f32 to vector<8x32xf32>
    %125 = arith.addf %124, %123 : vector<8x32xf32>
    %126 = arith.divf %124, %125 : vector<8x32xf32>
    %127 = vector.extract_strided_slice %114 {offsets = [0, 64], sizes = [8, 32], strides = [1, 1]} : vector<8x128xf32> to vector<8x32xf32>
    %128 = math.tanh %127 : vector<8x32xf32>
    %129 = vector.extract_strided_slice %114 {offsets = [0, 96], sizes = [8, 32], strides = [1, 1]} : vector<8x128xf32> to vector<8x32xf32>
    %130 = arith.negf %129 : vector<8x32xf32>
    %131 = math.exp %130 : vector<8x32xf32>
    %cst_36 = arith.constant 1.000000e+00 : f32
    %132 = vector.broadcast %cst_36 : f32 to vector<8x32xf32>
    %133 = arith.addf %132, %131 : vector<8x32xf32>
    %134 = arith.divf %132, %133 : vector<8x32xf32>
    %135 = arith.mulf %126, %104 : vector<8x32xf32>
    %136 = arith.mulf %120, %128 : vector<8x32xf32>
    %137 = arith.addf %135, %136 : vector<8x32xf32>
    %138 = math.tanh %137 : vector<8x32xf32>
    %139 = arith.mulf %134, %138 : vector<8x32xf32>
    %140 = arith.index_cast %110 : i32 to index
    %c0_37 = arith.constant 0 : index
    %141 = vector.load %arg9[%140, %c0_37] : memref<64x32xf32, #tpu.memory_space<vmem>>, vector<8x32xf32>
    tpu.vector_store %arg9[%140, %c0_37], %139 {strides = array<i32>} : memref<64x32xf32, #tpu.memory_space<vmem>>, vector<8x32xf32>,
    %c4_i32 = arith.constant 4 : i32
    %c8_i32_38 = arith.constant 8 : i32
    %142 = arith.muli %c4_i32, %c8_i32_38 : i32
    %143 = tpu.assume_multiple %142, 8 : i32
    %144 = arith.index_cast %143 : i32 to index
    %c0_39 = arith.constant 0 : index
    %145 = vector.load %arg8[%144, %c0_39] : memref<64x128xf32, #tpu.memory_space<vmem>>, vector<8x128xf32>
    %cst_40 = arith.constant dense<0.000000e+00> : vector<8x128xf32>
    %146 = tpu.matmul %139, %7, %cst_40 {dimension_numbers = #tpu.dot_dimension_numbers<[1], [0], [0], [1], [0, 0, 1, 1], [], []>} : vector<8x32xf32>, vector<32x128xf32>, vector<8x128xf32> -> vector<8x128xf32>
    %147 = arith.addf %145, %146 : vector<8x128xf32>
    %148 = vector.extract_strided_slice %147 {offsets = [0, 0], sizes = [8, 32], strides = [1, 1]} : vector<8x128xf32> to vector<8x32xf32>
    %149 = arith.negf %148 : vector<8x32xf32>
    %150 = math.exp %149 : vector<8x32xf32>
    %cst_41 = arith.constant 1.000000e+00 : f32
    %151 = vector.broadcast %cst_41 : f32 to vector<8x32xf32>
    %152 = arith.addf %151, %150 : vector<8x32xf32>
    %153 = arith.divf %151, %152 : vector<8x32xf32>
    %154 = vector.extract_strided_slice %147 {offsets = [0, 32], sizes = [8, 32], strides = [1, 1]} : vector<8x128xf32> to vector<8x32xf32>
    %155 = arith.negf %154 : vector<8x32xf32>
    %156 = math.exp %155 : vector<8x32xf32>
    %cst_42 = arith.constant 1.000000e+00 : f32
    %157 = vector.broadcast %cst_42 : f32 to vector<8x32xf32>
    %158 = arith.addf %157, %156 : vector<8x32xf32>
    %159 = arith.divf %157, %158 : vector<8x32xf32>
    %160 = vector.extract_strided_slice %147 {offsets = [0, 64], sizes = [8, 32], strides = [1, 1]} : vector<8x128xf32> to vector<8x32xf32>
    %161 = math.tanh %160 : vector<8x32xf32>
    %162 = vector.extract_strided_slice %147 {offsets = [0, 96], sizes = [8, 32], strides = [1, 1]} : vector<8x128xf32> to vector<8x32xf32>
    %163 = arith.negf %162 : vector<8x32xf32>
    %164 = math.exp %163 : vector<8x32xf32>
    %cst_43 = arith.constant 1.000000e+00 : f32
    %165 = vector.broadcast %cst_43 : f32 to vector<8x32xf32>
    %166 = arith.addf %165, %164 : vector<8x32xf32>
    %167 = arith.divf %165, %166 : vector<8x32xf32>
    %168 = arith.mulf %159, %137 : vector<8x32xf32>
    %169 = arith.mulf %153, %161 : vector<8x32xf32>
    %170 = arith.addf %168, %169 : vector<8x32xf32>
    %171 = math.tanh %170 : vector<8x32xf32>
    %172 = arith.mulf %167, %171 : vector<8x32xf32>
    %173 = arith.index_cast %143 : i32 to index
    %c0_44 = arith.constant 0 : index
    %174 = vector.load %arg9[%173, %c0_44] : memref<64x32xf32, #tpu.memory_space<vmem>>, vector<8x32xf32>
    tpu.vector_store %arg9[%173, %c0_44], %172 {strides = array<i32>} : memref<64x32xf32, #tpu.memory_space<vmem>>, vector<8x32xf32>,
    %c5_i32 = arith.constant 5 : i32
    %c8_i32_45 = arith.constant 8 : i32
    %175 = arith.muli %c5_i32, %c8_i32_45 : i32
    %176 = tpu.assume_multiple %175, 8 : i32
    %177 = arith.index_cast %176 : i32 to index
    %c0_46 = arith.constant 0 : index
    %178 = vector.load %arg8[%177, %c0_46] : memref<64x128xf32, #tpu.memory_space<vmem>>, vector<8x128xf32>
    %cst_47 = arith.constant dense<0.000000e+00> : vector<8x128xf32>
    %179 = tpu.matmul %172, %7, %cst_47 {dimension_numbers = #tpu.dot_dimension_numbers<[1], [0], [0], [1], [0, 0, 1, 1], [], []>} : vector<8x32xf32>, vector<32x128xf32>, vector<8x128xf32> -> vector<8x128xf32>
    %180 = arith.addf %178, %179 : vector<8x128xf32>
    %181 = vector.extract_strided_slice %180 {offsets = [0, 0], sizes = [8, 32], strides = [1, 1]} : vector<8x128xf32> to vector<8x32xf32>
    %182 = arith.negf %181 : vector<8x32xf32>
    %183 = math.exp %182 : vector<8x32xf32>
    %cst_48 = arith.constant 1.000000e+00 : f32
    %184 = vector.broadcast %cst_48 : f32 to vector<8x32xf32>
    %185 = arith.addf %184, %183 : vector<8x32xf32>
    %186 = arith.divf %184, %185 : vector<8x32xf32>
    %187 = vector.extract_strided_slice %180 {offsets = [0, 32], sizes = [8, 32], strides = [1, 1]} : vector<8x128xf32> to vector<8x32xf32>
    %188 = arith.negf %187 : vector<8x32xf32>
    %189 = math.exp %188 : vector<8x32xf32>
    %cst_49 = arith.constant 1.000000e+00 : f32
    %190 = vector.broadcast %cst_49 : f32 to vector<8x32xf32>
    %191 = arith.addf %190, %189 : vector<8x32xf32>
    %192 = arith.divf %190, %191 : vector<8x32xf32>
    %193 = vector.extract_strided_slice %180 {offsets = [0, 64], sizes = [8, 32], strides = [1, 1]} : vector<8x128xf32> to vector<8x32xf32>
    %194 = math.tanh %193 : vector<8x32xf32>
    %195 = vector.extract_strided_slice %180 {offsets = [0, 96], sizes = [8, 32], strides = [1, 1]} : vector<8x128xf32> to vector<8x32xf32>
    %196 = arith.negf %195 : vector<8x32xf32>
    %197 = math.exp %196 : vector<8x32xf32>
    %cst_50 = arith.constant 1.000000e+00 : f32
    %198 = vector.broadcast %cst_50 : f32 to vector<8x32xf32>
    %199 = arith.addf %198, %197 : vector<8x32xf32>
    %200 = arith.divf %198, %199 : vector<8x32xf32>
    %201 = arith.mulf %192, %170 : vector<8x32xf32>
    %202 = arith.mulf %186, %194 : vector<8x32xf32>
    %203 = arith.addf %201, %202 : vector<8x32xf32>
    %204 = math.tanh %203 : vector<8x32xf32>
    %205 = arith.mulf %200, %204 : vector<8x32xf32>
    %206 = arith.index_cast %176 : i32 to index
    %c0_51 = arith.constant 0 : index
    %207 = vector.load %arg9[%206, %c0_51] : memref<64x32xf32, #tpu.memory_space<vmem>>, vector<8x32xf32>
    tpu.vector_store %arg9[%206, %c0_51], %205 {strides = array<i32>} : memref<64x32xf32, #tpu.memory_space<vmem>>, vector<8x32xf32>,
    %c6_i32 = arith.constant 6 : i32
    %c8_i32_52 = arith.constant 8 : i32
    %208 = arith.muli %c6_i32, %c8_i32_52 : i32
    %209 = tpu.assume_multiple %208, 8 : i32
    %210 = arith.index_cast %209 : i32 to index
    %c0_53 = arith.constant 0 : index
    %211 = vector.load %arg8[%210, %c0_53] : memref<64x128xf32, #tpu.memory_space<vmem>>, vector<8x128xf32>
    %cst_54 = arith.constant dense<0.000000e+00> : vector<8x128xf32>
    %212 = tpu.matmul %205, %7, %cst_54 {dimension_numbers = #tpu.dot_dimension_numbers<[1], [0], [0], [1], [0, 0, 1, 1], [], []>} : vector<8x32xf32>, vector<32x128xf32>, vector<8x128xf32> -> vector<8x128xf32>
    %213 = arith.addf %211, %212 : vector<8x128xf32>
    %214 = vector.extract_strided_slice %213 {offsets = [0, 0], sizes = [8, 32], strides = [1, 1]} : vector<8x128xf32> to vector<8x32xf32>
    %215 = arith.negf %214 : vector<8x32xf32>
    %216 = math.exp %215 : vector<8x32xf32>
    %cst_55 = arith.constant 1.000000e+00 : f32
    %217 = vector.broadcast %cst_55 : f32 to vector<8x32xf32>
    %218 = arith.addf %217, %216 : vector<8x32xf32>
    %219 = arith.divf %217, %218 : vector<8x32xf32>
    %220 = vector.extract_strided_slice %213 {offsets = [0, 32], sizes = [8, 32], strides = [1, 1]} : vector<8x128xf32> to vector<8x32xf32>
    %221 = arith.negf %220 : vector<8x32xf32>
    %222 = math.exp %221 : vector<8x32xf32>
    %cst_56 = arith.constant 1.000000e+00 : f32
    %223 = vector.broadcast %cst_56 : f32 to vector<8x32xf32>
    %224 = arith.addf %223, %222 : vector<8x32xf32>
    %225 = arith.divf %223, %224 : vector<8x32xf32>
    %226 = vector.extract_strided_slice %213 {offsets = [0, 64], sizes = [8, 32], strides = [1, 1]} : vector<8x128xf32> to vector<8x32xf32>
    %227 = math.tanh %226 : vector<8x32xf32>
    %228 = vector.extract_strided_slice %213 {offsets = [0, 96], sizes = [8, 32], strides = [1, 1]} : vector<8x128xf32> to vector<8x32xf32>
    %229 = arith.negf %228 : vector<8x32xf32>
    %230 = math.exp %229 : vector<8x32xf32>
    %cst_57 = arith.constant 1.000000e+00 : f32
    %231 = vector.broadcast %cst_57 : f32 to vector<8x32xf32>
    %232 = arith.addf %231, %230 : vector<8x32xf32>
    %233 = arith.divf %231, %232 : vector<8x32xf32>
    %234 = arith.mulf %225, %203 : vector<8x32xf32>
    %235 = arith.mulf %219, %227 : vector<8x32xf32>
    %236 = arith.addf %234, %235 : vector<8x32xf32>
    %237 = math.tanh %236 : vector<8x32xf32>
    %238 = arith.mulf %233, %237 : vector<8x32xf32>
    %239 = arith.index_cast %209 : i32 to index
    %c0_58 = arith.constant 0 : index
    %240 = vector.load %arg9[%239, %c0_58] : memref<64x32xf32, #tpu.memory_space<vmem>>, vector<8x32xf32>
    tpu.vector_store %arg9[%239, %c0_58], %238 {strides = array<i32>} : memref<64x32xf32, #tpu.memory_space<vmem>>, vector<8x32xf32>,
    %c7_i32 = arith.constant 7 : i32
    %c8_i32_59 = arith.constant 8 : i32
    %241 = arith.muli %c7_i32, %c8_i32_59 : i32
    %242 = tpu.assume_multiple %241, 8 : i32
    %243 = arith.index_cast %242 : i32 to index
    %c0_60 = arith.constant 0 : index
    %244 = vector.load %arg8[%243, %c0_60] : memref<64x128xf32, #tpu.memory_space<vmem>>, vector<8x128xf32>
    %cst_61 = arith.constant dense<0.000000e+00> : vector<8x128xf32>
    %245 = tpu.matmul %238, %7, %cst_61 {dimension_numbers = #tpu.dot_dimension_numbers<[1], [0], [0], [1], [0, 0, 1, 1], [], []>} : vector<8x32xf32>, vector<32x128xf32>, vector<8x128xf32> -> vector<8x128xf32>
    %246 = arith.addf %244, %245 : vector<8x128xf32>
    %247 = vector.extract_strided_slice %246 {offsets = [0, 0], sizes = [8, 32], strides = [1, 1]} : vector<8x128xf32> to vector<8x32xf32>
    %248 = arith.negf %247 : vector<8x32xf32>
    %249 = math.exp %248 : vector<8x32xf32>
    %cst_62 = arith.constant 1.000000e+00 : f32
    %250 = vector.broadcast %cst_62 : f32 to vector<8x32xf32>
    %251 = arith.addf %250, %249 : vector<8x32xf32>
    %252 = arith.divf %250, %251 : vector<8x32xf32>
    %253 = vector.extract_strided_slice %246 {offsets = [0, 32], sizes = [8, 32], strides = [1, 1]} : vector<8x128xf32> to vector<8x32xf32>
    %254 = arith.negf %253 : vector<8x32xf32>
    %255 = math.exp %254 : vector<8x32xf32>
    %cst_63 = arith.constant 1.000000e+00 : f32
    %256 = vector.broadcast %cst_63 : f32 to vector<8x32xf32>
    %257 = arith.addf %256, %255 : vector<8x32xf32>
    %258 = arith.divf %256, %257 : vector<8x32xf32>
    %259 = vector.extract_strided_slice %246 {offsets = [0, 64], sizes = [8, 32], strides = [1, 1]} : vector<8x128xf32> to vector<8x32xf32>
    %260 = math.tanh %259 : vector<8x32xf32>
    %261 = vector.extract_strided_slice %246 {offsets = [0, 96], sizes = [8, 32], strides = [1, 1]} : vector<8x128xf32> to vector<8x32xf32>
    %262 = arith.negf %261 : vector<8x32xf32>
    %263 = math.exp %262 : vector<8x32xf32>
    %cst_64 = arith.constant 1.000000e+00 : f32
    %264 = vector.broadcast %cst_64 : f32 to vector<8x32xf32>
    %265 = arith.addf %264, %263 : vector<8x32xf32>
    %266 = arith.divf %264, %265 : vector<8x32xf32>
    %267 = arith.mulf %258, %236 : vector<8x32xf32>
    %268 = arith.mulf %252, %260 : vector<8x32xf32>
    %269 = arith.addf %267, %268 : vector<8x32xf32>
    %270 = math.tanh %269 : vector<8x32xf32>
    %271 = arith.mulf %266, %270 : vector<8x32xf32>
    %272 = arith.index_cast %242 : i32 to index
    %c0_65 = arith.constant 0 : index
    %273 = vector.load %arg9[%272, %c0_65] : memref<64x32xf32, #tpu.memory_space<vmem>>, vector<8x32xf32>
    tpu.vector_store %arg9[%272, %c0_65], %271 {strides = array<i32>} : memref<64x32xf32, #tpu.memory_space<vmem>>, vector<8x32xf32>,
    %c8_i32_66 = arith.constant 8 : i32
    %c0_67 = arith.constant 0 : index
    %c0_68 = arith.constant 0 : index
    %274 = vector.load %arg9[%c0_67, %c0_68] : memref<64x32xf32, #tpu.memory_space<vmem>>, vector<64x32xf32>
    %c0_69 = arith.constant 0 : index
    %c0_70 = arith.constant 0 : index
    %275 = vector.load %arg5[%c0_69, %c0_70] : memref<32x128xf32, #tpu.memory_space<vmem>>, vector<32x128xf32>
    %cst_71 = arith.constant dense<0.000000e+00> : vector<64x128xf32>
    %276 = tpu.matmul %274, %275, %cst_71 {dimension_numbers = #tpu.dot_dimension_numbers<[1], [0], [0], [1], [0, 0, 1, 1], [], []>} : vector<64x32xf32>, vector<32x128xf32>, vector<64x128xf32> -> vector<64x128xf32>
    %c0_72 = arith.constant 0 : index
    %c0_73 = arith.constant 0 : index
    %277 = vector.load %arg6[%c0_72, %c0_73] : memref<1x128xf32, #tpu.memory_space<vmem>>, vector<1x128xf32>
    %278 = vector.broadcast %277 : vector<1x128xf32> to vector<64x128xf32>
    %279 = arith.addf %276, %278 : vector<64x128xf32>
    %c0_74 = arith.constant 0 : index
    %c0_75 = arith.constant 0 : index
    %280 = vector.load %arg7[%c0_74, %c0_75] : memref<64x128xf32, #tpu.memory_space<vmem>>, vector<64x128xf32>
    tpu.vector_store %arg7[%c0_74, %c0_75], %279 {strides = array<i32>} : memref<64x128xf32, #tpu.memory_space<vmem>>, vector<64x128xf32>,
    return
  }
  func.func @transform_0(%arg0: i32) -> (i32, i32) {
    %c0_i32 = arith.constant 0 : i32
    %c0_i32_0 = arith.constant 0 : i32
    %c0_i32_1 = arith.constant 0 : i32
    return %c0_i32, %c0_i32_0 : i32, i32
  }
  func.func @transform_1(%arg0: i32) -> (i32, i32) {
    %c0_i32 = arith.constant 0 : i32
    %c0_i32_0 = arith.constant 0 : i32
    %c0_i32_1 = arith.constant 0 : i32
    return %c0_i32, %c0_i32_0 : i32, i32
  }
  func.func @transform_2(%arg0: i32) -> (i32, i32) {
    %c0_i32 = arith.constant 0 : i32
    %c0_i32_0 = arith.constant 0 : i32
    %c0_i32_1 = arith.constant 0 : i32
    return %c0_i32, %c0_i32_0 : i32, i32
  }
  func.func @transform_3(%arg0: i32) -> (i32, i32) {
    %c0_i32 = arith.constant 0 : i32
    %c0_i32_0 = arith.constant 0 : i32
    %c0_i32_1 = arith.constant 0 : i32
    return %c0_i32, %c0_i32_0 : i32, i32
  }
  func.func @transform_4(%arg0: i32) -> (i32, i32) {
    %c0_i32 = arith.constant 0 : i32
    %c0_i32_0 = arith.constant 0 : i32
    %c0_i32_1 = arith.constant 0 : i32
    return %c0_i32, %c0_i32_0 : i32, i32
  }
  func.func @transform_5(%arg0: i32) -> (i32, i32) {
    %c0_i32 = arith.constant 0 : i32
    %c0_i32_0 = arith.constant 0 : i32
    %c0_i32_1 = arith.constant 0 : i32
    return %c0_i32, %c0_i32_0 : i32, i32
  }
  func.func @transform_6(%arg0: i32) -> (i32, i32) {
    %c0_i32 = arith.constant 0 : i32
    %c0_i32_0 = arith.constant 0 : i32
    %c0_i32_1 = arith.constant 0 : i32
    return %c0_i32, %c0_i32_0 : i32, i32
  }
}

</mosaic_0001>

<llo_original>
// kernel: tpu_custom_call.1
$region0: #{tpu_custom_call.1}
  #allocation0 [shape = 'u32[]', space=smem, size = 0x4, offset = 0x4, fixed_abs, tag = 'smem constant byte address 0x4 - core index']
  #allocation1 [shape = 'u32[144,128]{1,0:T(1,128)}', space=vmem, size = 0x12000, scoped, tag = 'internal scratch']
  #allocation2 [shape = 'f32[64,128]{1,0:T(8,128)}', space=vmem, size = 0x8000, scoped, tag = 'scratch operand']
  #allocation3 [shape = 'f32[64,32]{1,0:T(8,128)}', space=vmem, size = 0x8000, scoped, tag = 'scratch operand']
  %s0 = inlined_call_operand.vmem [shape: f32[64,32], index: 0, kind: input, shape index: {}]
  %s1 = inlined_call_operand.vmem [shape: f32[32,128], index: 1, kind: input, shape index: {}]
  %s2 = inlined_call_operand.vmem [shape: f32[32,128], index: 2, kind: input, shape index: {}]
  %s3 = inlined_call_operand.vmem [shape: f32[1,128], index: 3, kind: input, shape index: {}]
  %s4 = inlined_call_operand.vmem [shape: f32[32,128], index: 4, kind: input, shape index: {}]
  %s5 = inlined_call_operand.vmem [shape: f32[1,128], index: 5, kind: input, shape index: {}]
  %s6 = inlined_call_operand.hbm [shape: f32[64,128], index: 6, kind: output, shape index: {}]
  %s7 = sld [smem:[#allocation0]]
  $region34: #{tpu_custom_call.1} parent=0
    _
  %s9 = ssub.s32 1, %s7
  %s10 = scalar_select 0, %s9, %s7
  $region1: #{tpu_custom_call.1} parent=0
    #allocation4 [shape = 'u8[32768]{0}', space=vmem, size = 0x8000, scoped, tag = 'output window, operand 0, single buffered']
    #allocation5 [shape = 's32[1]{0}', space=sflag, size = 0x4, scoped, tag = 'scoped memory for tpu_custom_call.1']
    %11 = vsyncpa [#allocation5], 0
    // Predicated region
    $region2: #{tpu_custom_call.1} parent=1 // pred_check
      _
    $region3: #{tpu_custom_call.1} parent=1 // pred_check_branch
      %13 = sbr.rel (0) target = $region5
    $region4: #{tpu_custom_call.1} parent=1 // pred_region
      _
    $region5: #{tpu_custom_call.1} parent=1 // pred_fallthru
      _
    // Predicated region
    $region6: #{tpu_custom_call.1} parent=1 // pred_check
      _
    $region7: #{tpu_custom_call.1} parent=1 // pred_check_branch
      %15 = sbr.rel (0) target = $region9
    $region8: #{tpu_custom_call.1} parent=1 // pred_region
      _
    $region9: #{tpu_custom_call.1} parent=1 // pred_fallthru
      _
    // Predicated region
    $region10: #{tpu_custom_call.1} parent=1 // pred_check
      _
    $region11: #{tpu_custom_call.1} parent=1 // pred_check_branch
      %17 = sbr.rel (0) target = $region13
    $region12: #{tpu_custom_call.1} parent=1 // pred_region
      _
    $region13: #{tpu_custom_call.1} parent=1 // pred_fallthru
      _
    // Predicated region
    $region14: #{tpu_custom_call.1} parent=1 // pred_check
      _
    $region15: #{tpu_custom_call.1} parent=1 // pred_check_branch
      %19 = sbr.rel (0) target = $region17
    $region16: #{tpu_custom_call.1} parent=1 // pred_region
      _
    $region17: #{tpu_custom_call.1} parent=1 // pred_fallthru
      _
    // Predicated region
    $region18: #{tpu_custom_call.1} parent=1 // pred_check
      _
    $region19: #{tpu_custom_call.1} parent=1 // pred_check_branch
      %21 = sbr.rel (0) target = $region21
    $region20: #{tpu_custom_call.1} parent=1 // pred_region
      _
    $region21: #{tpu_custom_call.1} parent=1 // pred_fallthru
      _
    // Predicated region
    $region22: #{tpu_custom_call.1} parent=1 // pred_check
      _
    $region23: #{tpu_custom_call.1} parent=1 // pred_check_branch
      %23 = sbr.rel (0) target = $region25
    $region24: #{tpu_custom_call.1} parent=1 // pred_region
      _
    $region25: #{tpu_custom_call.1} parent=1 // pred_fallthru
      _
    %v24 = vld [vmem:[%s0] sm:$0xff]
    %v25 = vld [vmem:[%s0 + $0x8] sm:$0xff]
    %v26 = vld [vmem:[%s0 + $0x10] sm:$0xff]
    %v27 = vld [vmem:[%s0 + $0x18] sm:$0xff]
    %v28 = vld [vmem:[%s0 + $0x20] sm:$0xff]
    %v29 = vld [vmem:[%s0 + $0x28] sm:$0xff]
    %v30 = vld [vmem:[%s0 + $0x30] sm:$0xff]
    %v31 = vld [vmem:[%s0 + $0x38] sm:$0xff]
    %v32 = vld [vmem:[%s1] sm:$0xff]
    %v33 = vld [vmem:[%s1 + $0x8] sm:$0xff]
    %v34 = vld [vmem:[%s1 + $0x10] sm:$0xff]
    %v35 = vld [vmem:[%s1 + $0x18] sm:$0xff]
    %v36 = vld [vmem:[%s3] sm:$0x1]
    %v38 = vlaneseq
    %v39 = vshrl.u32 %v38, 7
    %v40 = vsub.s32 0, %v39
    %v41 = vrot.slane %v36, %v40
    %vm43 = vcmask 261120
    %v45 = vsel %vm43, %v24, 0
    %v48 = vsel %vm43, %v25, 0
    %v51 = vsel %vm43, %v26, 0
    %v54 = vsel %vm43, %v27, 0
    %v57 = vsel %vm43, %v28, 0
    %v60 = vsel %vm43, %v29, 0
    %v63 = vsel %vm43, %v30, 0
    %v66 = vsel %vm43, %v31, 0
    %68 = vmatprep.subr.mxu0 0.0
    %69 = vmatpush1.msra.mxu0 %v32
    %70 = vmatprep.subr.mxu0 0.0
    %71 = vmatpush1.msra.mxu0 %v33
    %72 = vmatprep.subr.mxu0 0.0
    %73 = vmatpush1.msra.mxu0 %v34
    %74 = vmatprep.subr.mxu0 0.0
    %75 = vmatpush1.msra.mxu0 %v35
    %76 = vmatprep.subr.mxu0 0.0
    %77 = vmatpush1.msra.mxu0 0.0
    %78 = vmatprep.subr.mxu0 0.0
    %79 = vmatpush1.msra.mxu0 0.0
    %80 = vmatprep.subr.mxu0 0.0
    %81 = vmatpush1.msra.mxu0 0.0
    %82 = vmatprep.subr.mxu0 0.0
    %83 = vmatpush1.msra.mxu0 0.0
    %84 = vmatprep.subr.mxu0 0.0
    %85 = vmatpush1.msra.mxu0 0.0
    %86 = vmatprep.subr.mxu0 0.0
    %87 = vmatpush1.msra.mxu0 0.0
    %88 = vmatprep.subr.mxu0 0.0
    %89 = vmatpush1.msra.mxu0 0.0
    %90 = vmatprep.subr.mxu0 0.0
    %91 = vmatpush1.msra.mxu0 0.0
    %92 = vmatprep.subr.mxu0 0.0
    %93 = vmatpush1.msra.mxu0 0.0
    %94 = vmatprep.subr.mxu0 0.0
    %95 = vmatpush1.msra.mxu0 0.0
    %96 = vmatprep.subr.mxu0 0.0
    %97 = vmatpush1.msra.mxu0 0.0
    %98 = vmatprep.subr.mxu0 0.0
    %99 = vmatpush1.msra.mxu0 0.0
    %100 = vmatprep.subr.mxu0 0.0
    %101 = vmatpush1.msra.mxu0 0.0
    %102 = vmatprep.subr.mxu0 0.0
    %103 = vmatpush1.msra.mxu0 0.0
    %104 = vmatprep.subr.mxu0 0.0
    %105 = vmatpush1.msra.mxu0 0.0
    %106 = vmatprep.subr.mxu0 0.0
    %107 = vmatpush1.msra.mxu0 0.0
    %108 = vmatprep.subr.mxu0 0.0
    %109 = vmatpush1.msra.mxu0 0.0
    %110 = vmatprep.subr.mxu0 0.0
    %111 = vmatpush1.msra.mxu0 0.0
    %112 = vmatprep.subr.mxu0 0.0
    %113 = vmatpush1.msra.mxu0 0.0
    %114 = vmatprep.subr.mxu0 0.0
    %115 = vmatpush1.msra.mxu0 0.0
    %116 = vmatprep.subr.mxu0 0.0
    %117 = vmatpush1.msra.mxu0 0.0
    %118 = vmatprep.subr.mxu0 0.0
    %119 = vmatpush1.msra.mxu0 0.0
    %120 = vmatprep.subr.mxu0 0.0
    %121 = vmatpush1.msra.mxu0 0.0
    %122 = vmatprep.subr.mxu0 0.0
    %123 = vmatpush1.msra.mxu0 0.0
    %124 = vmatprep.subr.mxu0 0.0
    %125 = vmatpush1.msra.mxu0 0.0
    %126 = vmatprep.subr.mxu0 0.0
    %127 = vmatpush1.msra.mxu0 0.0
    %128 = vmatprep.subr.mxu0 0.0
    %129 = vmatpush1.msra.mxu0 0.0
    %130 = vmatprep.subr.mxu0 0.0
    %131 = vmatpush1.msra.mxu0 0.0
    %132 = vmatprep.mubr.f32.mxu0 0.0
    %133 = vmatmul.mubr.f32.gmra.mrb[0].mxu0 %v45
    %v134 = vpop.f32.mrb[0].mxu0
    %v135 = vadd.f32 %v41, %v134
    %v136 = vpop.f32.mrb[0].mxu0
    %137 = vmatprep.mubr.f32.mxu0 0.0
    %138 = vmatmul.mubr.f32.gmra.mrb[0].mxu0 %v48
    %v139 = vpop.f32.mrb[0].mxu0
    %v140 = vadd.f32 %v41, %v139
    %v141 = vpop.f32.mrb[0].mxu0
    %142 = vmatprep.mubr.f32.mxu0 0.0
    %143 = vmatmul.mubr.f32.gmra.mrb[0].mxu0 %v51
    %v144 = vpop.f32.mrb[0].mxu0
    %v145 = vadd.f32 %v41, %v144
    %v146 = vpop.f32.mrb[0].mxu0
    %147 = vmatprep.mubr.f32.mxu0 0.0
    %148 = vmatmul.mubr.f32.gmra.mrb[0].mxu0 %v54
    %v149 = vpop.f32.mrb[0].mxu0
    %v150 = vadd.f32 %v41, %v149
    %v151 = vpop.f32.mrb[0].mxu0
    %152 = vmatprep.mubr.f32.mxu0 0.0
    %153 = vmatmul.mubr.f32.gmra.mrb[0].mxu0 %v57
    %v154 = vpop.f32.mrb[0].mxu0
    %v155 = vadd.f32 %v41, %v154
    %v156 = vpop.f32.mrb[0].mxu0
    %157 = vmatprep.mubr.f32.mxu0 0.0
    %158 = vmatmul.mubr.f32.gmra.mrb[0].mxu0 %v60
    %v159 = vpop.f32.mrb[0].mxu0
    %v160 = vadd.f32 %v41, %v159
    %v161 = vpop.f32.mrb[0].mxu0
    %162 = vmatprep.mubr.f32.mxu0 0.0
    %163 = vmatmul.mubr.f32.gmra.mrb[0].mxu0 %v63
    %v164 = vpop.f32.mrb[0].mxu0
    %v165 = vadd.f32 %v41, %v164
    %v166 = vpop.f32.mrb[0].mxu0
    %167 = vmatprep.mubr.f32.mxu0 0.0
    %168 = vmatmul.mubr.f32.gmra.mrb[0].mxu0 %v66
    %v169 = vpop.f32.mrb[0].mxu0
    %v170 = vadd.f32 %v41, %v169
    %v171 = vpop.f32.mrb[0].mxu0
    %172 = vdwg.mxu0
    %173 = vst [vmem:[#allocation2] sm:$0xff] %v135
    %174 = vst [vmem:[#allocation2 + $0x8] sm:$0xff] %v140
    %175 = vst [vmem:[#allocation2 + $0x10] sm:$0xff] %v145
    %176 = vst [vmem:[#allocation2 + $0x18] sm:$0xff] %v150
    %177 = vst [vmem:[#allocation2 + $0x20] sm:$0xff] %v155
    %178 = vst [vmem:[#allocation2 + $0x28] sm:$0xff] %v160
    %179 = vst [vmem:[#allocation2 + $0x30] sm:$0xff] %v165
    %180 = vst [vmem:[#allocation2 + $0x38] sm:$0xff] %v170
    %v181 = vld [vmem:[%s2] sm:$0xff]
    %v182 = vld [vmem:[%s2 + $0x8] sm:$0xff]
    %v183 = vld [vmem:[%s2 + $0x10] sm:$0xff]
    %v184 = vld [vmem:[%s2 + $0x18] sm:$0xff]
    %v185 = vld [vmem:[#allocation2] sm:$0xff]
    %v187 = vsel %vm43, 0.0, 0
    %189 = vmatprep.subr.mxu0 0.0
    %190 = vmatpush1.msra.mxu0 %v181
    %191 = vmatprep.subr.mxu0 0.0
    %192 = vmatpush1.msra.mxu0 %v182
    %193 = vmatprep.subr.mxu0 0.0
    %194 = vmatpush1.msra.mxu0 %v183
    %195 = vmatprep.subr.mxu0 0.0
    %196 = vmatpush1.msra.mxu0 %v184
    %197 = vmatprep.subr.mxu0 0.0
    %198 = vmatpush1.msra.mxu0 0.0
    %199 = vmatprep.subr.mxu0 0.0
    %200 = vmatpush1.msra.mxu0 0.0
    %201 = vmatprep.subr.mxu0 0.0
    %202 = vmatpush1.msra.mxu0 0.0
    %203 = vmatprep.subr.mxu0 0.0
    %204 = vmatpush1.msra.mxu0 0.0
    %205 = vmatprep.subr.mxu0 0.0
    %206 = vmatpush1.msra.mxu0 0.0
    %207 = vmatprep.subr.mxu0 0.0
    %208 = vmatpush1.msra.mxu0 0.0
    %209 = vmatprep.subr.mxu0 0.0
    %210 = vmatpush1.msra.mxu0 0.0
    %211 = vmatprep.subr.mxu0 0.0
    %212 = vmatpush1.msra.mxu0 0.0
    %213 = vmatprep.subr.mxu0 0.0
    %214 = vmatpush1.msra.mxu0 0.0
    %215 = vmatprep.subr.mxu0 0.0
    %216 = vmatpush1.msra.mxu0 0.0
    %217 = vmatprep.subr.mxu0 0.0
    %218 = vmatpush1.msra.mxu0 0.0
    %219 = vmatprep.subr.mxu0 0.0
    %220 = vmatpush1.msra.mxu0 0.0
    %221 = vmatprep.subr.mxu0 0.0
    %222 = vmatpush1.msra.mxu0 0.0
    %223 = vmatprep.subr.mxu0 0.0
    %224 = vmatpush1.msra.mxu0 0.0
    %225 = vmatprep.subr.mxu0 0.0
    %226 = vmatpush1.msra.mxu0 0.0
    %227 = vmatprep.subr.mxu0 0.0
    %228 = vmatpush1.msra.mxu0 0.0
    %229 = vmatprep.subr.mxu0 0.0
    %230 = vmatpush1.msra.mxu0 0.0
    %231 = vmatprep.subr.mxu0 0.0
    %232 = vmatpush1.msra.mxu0 0.0
    %233 = vmatprep.subr.mxu0 0.0
    %234 = vmatpush1.msra.mxu0 0.0
    %235 = vmatprep.subr.mxu0 0.0
    %236 = vmatpush1.msra.mxu0 0.0
    %237 = vmatprep.subr.mxu0 0.0
    %238 = vmatpush1.msra.mxu0 0.0
    %239 = vmatprep.subr.mxu0 0.0
    %240 = vmatpush1.msra.mxu0 0.0
    %241 = vmatprep.subr.mxu0 0.0
    %242 = vmatpush1.msra.mxu0 0.0
    %243 = vmatprep.subr.mxu0 0.0
    %244 = vmatpush1.msra.mxu0 0.0
    %245 = vmatprep.subr.mxu0 0.0
    %246 = vmatpush1.msra.mxu0 0.0
    %247 = vmatprep.subr.mxu0 0.0
    %248 = vmatpush1.msra.mxu0 0.0
    %249 = vmatprep.subr.mxu0 0.0
    %250 = vmatpush1.msra.mxu0 0.0
    %251 = vmatprep.subr.mxu0 0.0
    %252 = vmatpush1.msra.mxu0 0.0
    %253 = vmatprep.mubr.f32.mxu0 0.0
    %254 = vmatmul.mubr.f32.gmra.mrb[0].mxu0 %v187
    %v255 = vpop.f32.mrb[0].mxu0
    %v256 = vadd.f32 0.0, %v255
    %v257 = vpop.f32.mrb[0].mxu0
    %258 = vdwg.mxu0
    %v259 = vadd.f32 %v185, %v256
    %v260 = vxor.u32 %v259, 2147483648
    %v261 = vmul.f32 %v260, 1.442695
    %v262 = vpow.pop %v261
    %v263 = vadd.f32 %v262, 1.0
    %v264 = vrcp.pop %v263
    %v265 = vmul.f32 1.0, %v264
    %v266 = vtanh.pop %v259
    %v267 = vmul.f32 %v265, 0.0
    %269 = vrot.lane.b32.xlu0 %v266, 64
    %v270 = vpop.permute.xlu0 %269
    %v272 = vmul.f32 %v265, %v270
    %274 = vrot.lane.b32.xlu0 %v272, 32
    %v275 = vpop.permute.xlu0 %274
    %v277 = vadd.f32 %v267, %v275
    %v278 = vtanh.pop %v277
    %280 = vrot.lane.b32.xlu0 %v278, 64
    %v281 = vpop.permute.xlu0 %280
    %v283 = vmul.f32 %v265, %v281
    %285 = vrot.lane.b32.xlu0 %v283, 32
    %v286 = vpop.permute.xlu0 %285
    %288 = vst.msk [vmem:[#allocation3] sm:$0xff] %vm43, %v286
    %s289 = scalar_lea.vmem [#allocation2], 8
    %v290 = vld [vmem:[%s289] sm:$0xff]
    %v291 = vsel %vm43, %v286, 0
    %293 = vmatprep.subr.mxu0 0.0
    %294 = vmatpush1.msra.mxu0 %v181
    %295 = vmatprep.subr.mxu0 0.0
    %296 = vmatpush1.msra.mxu0 %v182
    %297 = vmatprep.subr.mxu0 0.0
    %298 = vmatpush1.msra.mxu0 %v183
    %299 = vmatprep.subr.mxu0 0.0
    %300 = vmatpush1.msra.mxu0 %v184
    %301 = vmatprep.subr.mxu0 0.0
    %302 = vmatpush1.msra.mxu0 0.0
    %303 = vmatprep.subr.mxu0 0.0
    %304 = vmatpush1.msra.mxu0 0.0
    %305 = vmatprep.subr.mxu0 0.0
    %306 = vmatpush1.msra.mxu0 0.0
    %307 = vmatprep.subr.mxu0 0.0
    %308 = vmatpush1.msra.mxu0 0.0
    %309 = vmatprep.subr.mxu0 0.0
    %310 = vmatpush1.msra.mxu0 0.0
    %311 = vmatprep.subr.mxu0 0.0
    %312 = vmatpush1.msra.mxu0 0.0
    %313 = vmatprep.subr.mxu0 0.0
    %314 = vmatpush1.msra.mxu0 0.0
    %315 = vmatprep.subr.mxu0 0.0
    %316 = vmatpush1.msra.mxu0 0.0
    %317 = vmatprep.subr.mxu0 0.0
    %318 = vmatpush1.msra.mxu0 0.0
    %319 = vmatprep.subr.mxu0 0.0
    %320 = vmatpush1.msra.mxu0 0.0
    %321 = vmatprep.subr.mxu0 0.0
    %322 = vmatpush1.msra.mxu0 0.0
    %323 = vmatprep.subr.mxu0 0.0
    %324 = vmatpush1.msra.mxu0 0.0
    %325 = vmatprep.subr.mxu0 0.0
    %326 = vmatpush1.msra.mxu0 0.0
    %327 = vmatprep.subr.mxu0 0.0
    %328 = vmatpush1.msra.mxu0 0.0
    %329 = vmatprep.subr.mxu0 0.0
    %330 = vmatpush1.msra.mxu0 0.0
    %331 = vmatprep.subr.mxu0 0.0
    %332 = vmatpush1.msra.mxu0 0.0
    %333 = vmatprep.subr.mxu0 0.0
    %334 = vmatpush1.msra.mxu0 0.0
    %335 = vmatprep.subr.mxu0 0.0
    %336 = vmatpush1.msra.mxu0 0.0
    %337 = vmatprep.subr.mxu0 0.0
    %338 = vmatpush1.msra.mxu0 0.0
    %339 = vmatprep.subr.mxu0 0.0
    %340 = vmatpush1.msra.mxu0 0.0
    %341 = vmatprep.subr.mxu0 0.0
    %342 = vmatpush1.msra.mxu0 0.0
    %343 = vmatprep.subr.mxu0 0.0
    %344 = vmatpush1.msra.mxu0 0.0
    %345 = vmatprep.subr.mxu0 0.0
    %346 = vmatpush1.msra.mxu0 0.0
    %347 = vmatprep.subr.mxu0 0.0
    %348 = vmatpush1.msra.mxu0 0.0
    %349 = vmatprep.subr.mxu0 0.0
    %350 = vmatpush1.msra.mxu0 0.0
    %351 = vmatprep.subr.mxu0 0.0
    %352 = vmatpush1.msra.mxu0 0.0
    %353 = vmatprep.subr.mxu0 0.0
    %354 = vmatpush1.msra.mxu0 0.0
    %355 = vmatprep.subr.mxu0 0.0
    %356 = vmatpush1.msra.mxu0 0.0
    %357 = vmatprep.mubr.f32.mxu0 0.0
    %358 = vmatmul.mubr.f32.gmra.mrb[0].mxu0 %v291
    %v359 = vpop.f32.mrb[0].mxu0
    %v360 = vadd.f32 0.0, %v359
    %v361 = vpop.f32.mrb[0].mxu0
    %362 = vdwg.mxu0
    %v363 = vadd.f32 %v290, %v360
    %v364 = vxor.u32 %v363, 2147483648
    %v365 = vmul.f32 %v364, 1.442695
    %v366 = vpow.pop %v365
    %v367 = vadd.f32 %v366, 1.0
    %v368 = vrcp.pop %v367
    %v369 = vmul.f32 1.0, %v368
    %v370 = vtanh.pop %v363
    %v371 = vmul.f32 %v369, %v277
    %373 = vrot.lane.b32.xlu0 %v370, 64
    %v374 = vpop.permute.xlu0 %373
    %v376 = vmul.f32 %v369, %v374
    %378 = vrot.lane.b32.xlu0 %v376, 32
    %v379 = vpop.permute.xlu0 %378
    %v381 = vadd.f32 %v371, %v379
    %v382 = vtanh.pop %v381
    %384 = vrot.lane.b32.xlu0 %v382, 64
    %v385 = vpop.permute.xlu0 %384
    %v387 = vmul.f32 %v369, %v385
    %389 = vrot.lane.b32.xlu0 %v387, 32
    %v390 = vpop.permute.xlu0 %389
    %s392 = scalar_lea.vmem [#allocation3], 8
    %393 = vst.msk [vmem:[%s392] sm:$0xff] %vm43, %v390
    %s394 = scalar_lea.vmem [#allocation2], 16
    %v395 = vld [vmem:[%s394] sm:$0xff]
    %v396 = vsel %vm43, %v390, 0
    %398 = vmatprep.subr.mxu0 0.0
    %399 = vmatpush1.msra.mxu0 %v181
    %400 = vmatprep.subr.mxu0 0.0
    %401 = vmatpush1.msra.mxu0 %v182
    %402 = vmatprep.subr.mxu0 0.0
    %403 = vmatpush1.msra.mxu0 %v183
    %404 = vmatprep.subr.mxu0 0.0
    %405 = vmatpush1.msra.mxu0 %v184
    %406 = vmatprep.subr.mxu0 0.0
    %407 = vmatpush1.msra.mxu0 0.0
    %408 = vmatprep.subr.mxu0 0.0
    %409 = vmatpush1.msra.mxu0 0.0
    %410 = vmatprep.subr.mxu0 0.0
    %411 = vmatpush1.msra.mxu0 0.0
    %412 = vmatprep.subr.mxu0 0.0
    %413 = vmatpush1.msra.mxu0 0.0
    %414 = vmatprep.subr.mxu0 0.0
    %415 = vmatpush1.msra.mxu0 0.0
    %416 = vmatprep.subr.mxu0 0.0
    %417 = vmatpush1.msra.mxu0 0.0
    %418 = vmatprep.subr.mxu0 0.0
    %419 = vmatpush1.msra.mxu0 0.0
    %420 = vmatprep.subr.mxu0 0.0
    %421 = vmatpush1.msra.mxu0 0.0
    %422 = vmatprep.subr.mxu0 0.0
    %423 = vmatpush1.msra.mxu0 0.0
    %424 = vmatprep.subr.mxu0 0.0
    %425 = vmatpush1.msra.mxu0 0.0
    %426 = vmatprep.subr.mxu0 0.0
    %427 = vmatpush1.msra.mxu0 0.0
    %428 = vmatprep.subr.mxu0 0.0
    %429 = vmatpush1.msra.mxu0 0.0
    %430 = vmatprep.subr.mxu0 0.0
    %431 = vmatpush1.msra.mxu0 0.0
    %432 = vmatprep.subr.mxu0 0.0
    %433 = vmatpush1.msra.mxu0 0.0
    %434 = vmatprep.subr.mxu0 0.0
    %435 = vmatpush1.msra.mxu0 0.0
    %436 = vmatprep.subr.mxu0 0.0
    %437 = vmatpush1.msra.mxu0 0.0
    %438 = vmatprep.subr.mxu0 0.0
    %439 = vmatpush1.msra.mxu0 0.0
    %440 = vmatprep.subr.mxu0 0.0
    %441 = vmatpush1.msra.mxu0 0.0
    %442 = vmatprep.subr.mxu0 0.0
    %443 = vmatpush1.msra.mxu0 0.0
    %444 = vmatprep.subr.mxu0 0.0
    %445 = vmatpush1.msra.mxu0 0.0
    %446 = vmatprep.subr.mxu0 0.0
    %447 = vmatpush1.msra.mxu0 0.0
    %448 = vmatprep.subr.mxu0 0.0
    %449 = vmatpush1.msra.mxu0 0.0
    %450 = vmatprep.subr.mxu0 0.0
    %451 = vmatpush1.msra.mxu0 0.0
    %452 = vmatprep.subr.mxu0 0.0
    %453 = vmatpush1.msra.mxu0 0.0
    %454 = vmatprep.subr.mxu0 0.0
    %455 = vmatpush1.msra.mxu0 0.0
    %456 = vmatprep.subr.mxu0 0.0
    %457 = vmatpush1.msra.mxu0 0.0
    %458 = vmatprep.subr.mxu0 0.0
    %459 = vmatpush1.msra.mxu0 0.0
    %460 = vmatprep.subr.mxu0 0.0
    %461 = vmatpush1.msra.mxu0 0.0
    %462 = vmatprep.mubr.f32.mxu0 0.0
    %463 = vmatmul.mubr.f32.gmra.mrb[0].mxu0 %v396
    %v464 = vpop.f32.mrb[0].mxu0
    %v465 = vadd.f32 0.0, %v464
    %v466 = vpop.f32.mrb[0].mxu0
    %467 = vdwg.mxu0
    %v468 = vadd.f32 %v395, %v465
    %v469 = vxor.u32 %v468, 2147483648
    %v470 = vmul.f32 %v469, 1.442695
    %v471 = vpow.pop %v470
    %v472 = vadd.f32 %v471, 1.0
    %v473 = vrcp.pop %v472
    %v474 = vmul.f32 1.0, %v473
    %v475 = vtanh.pop %v468
    %v476 = vmul.f32 %v474, %v381
    %478 = vrot.lane.b32.xlu0 %v475, 64
    %v479 = vpop.permute.xlu0 %478
    %v481 = vmul.f32 %v474, %v479
    %483 = vrot.lane.b32.xlu0 %v481, 32
    %v484 = vpop.permute.xlu0 %483
    %v486 = vadd.f32 %v476, %v484
    %v487 = vtanh.pop %v486
    %489 = vrot.lane.b32.xlu0 %v487, 64
    %v490 = vpop.permute.xlu0 %489
    %v492 = vmul.f32 %v474, %v490
    %494 = vrot.lane.b32.xlu0 %v492, 32
    %v495 = vpop.permute.xlu0 %494
    %s497 = scalar_lea.vmem [#allocation3], 16
    %498 = vst.msk [vmem:[%s497] sm:$0xff] %vm43, %v495
    %s499 = scalar_lea.vmem [#allocation2], 24
    %v500 = vld [vmem:[%s499] sm:$0xff]
    %v501 = vsel %vm43, %v495, 0
    %503 = vmatprep.subr.mxu0 0.0
    %504 = vmatpush1.msra.mxu0 %v181
    %505 = vmatprep.subr.mxu0 0.0
    %506 = vmatpush1.msra.mxu0 %v182
    %507 = vmatprep.subr.mxu0 0.0
    %508 = vmatpush1.msra.mxu0 %v183
    %509 = vmatprep.subr.mxu0 0.0
    %510 = vmatpush1.msra.mxu0 %v184
    %511 = vmatprep.subr.mxu0 0.0
    %512 = vmatpush1.msra.mxu0 0.0
    %513 = vmatprep.subr.mxu0 0.0
    %514 = vmatpush1.msra.mxu0 0.0
    %515 = vmatprep.subr.mxu0 0.0
    %516 = vmatpush1.msra.mxu0 0.0
    %517 = vmatprep.subr.mxu0 0.0
    %518 = vmatpush1.msra.mxu0 0.0
    %519 = vmatprep.subr.mxu0 0.0
    %520 = vmatpush1.msra.mxu0 0.0
    %521 = vmatprep.subr.mxu0 0.0
    %522 = vmatpush1.msra.mxu0 0.0
    %523 = vmatprep.subr.mxu0 0.0
    %524 = vmatpush1.msra.mxu0 0.0
    %525 = vmatprep.subr.mxu0 0.0
    %526 = vmatpush1.msra.mxu0 0.0
    %527 = vmatprep.subr.mxu0 0.0
    %528 = vmatpush1.msra.mxu0 0.0
    %529 = vmatprep.subr.mxu0 0.0
    %530 = vmatpush1.msra.mxu0 0.0
    %531 = vmatprep.subr.mxu0 0.0
    %532 = vmatpush1.msra.mxu0 0.0
    %533 = vmatprep.subr.mxu0 0.0
    %534 = vmatpush1.msra.mxu0 0.0
    %535 = vmatprep.subr.mxu0 0.0
    %536 = vmatpush1.msra.mxu0 0.0
    %537 = vmatprep.subr.mxu0 0.0
    %538 = vmatpush1.msra.mxu0 0.0
    %539 = vmatprep.subr.mxu0 0.0
    %540 = vmatpush1.msra.mxu0 0.0
    %541 = vmatprep.subr.mxu0 0.0
    %542 = vmatpush1.msra.mxu0 0.0
    %543 = vmatprep.subr.mxu0 0.0
    %544 = vmatpush1.msra.mxu0 0.0
    %545 = vmatprep.subr.mxu0 0.0
    %546 = vmatpush1.msra.mxu0 0.0
    %547 = vmatprep.subr.mxu0 0.0
    %548 = vmatpush1.msra.mxu0 0.0
    %549 = vmatprep.subr.mxu0 0.0
    %550 = vmatpush1.msra.mxu0 0.0
    %551 = vmatprep.subr.mxu0 0.0
    %552 = vmatpush1.msra.mxu0 0.0
    %553 = vmatprep.subr.mxu0 0.0
    %554 = vmatpush1.msra.mxu0 0.0
    %555 = vmatprep.subr.mxu0 0.0
    %556 = vmatpush1.msra.mxu0 0.0
    %557 = vmatprep.subr.mxu0 0.0
    %558 = vmatpush1.msra.mxu0 0.0
    %559 = vmatprep.subr.mxu0 0.0
    %560 = vmatpush1.msra.mxu0 0.0
    %561 = vmatprep.subr.mxu0 0.0
    %562 = vmatpush1.msra.mxu0 0.0
    %563 = vmatprep.subr.mxu0 0.0
    %564 = vmatpush1.msra.mxu0 0.0
    %565 = vmatprep.subr.mxu0 0.0
    %566 = vmatpush1.msra.mxu0 0.0
    %567 = vmatprep.mubr.f32.mxu0 0.0
    %568 = vmatmul.mubr.f32.gmra.mrb[0].mxu0 %v501
    %v569 = vpop.f32.mrb[0].mxu0
    %v570 = vadd.f32 0.0, %v569
    %v571 = vpop.f32.mrb[0].mxu0
    %572 = vdwg.mxu0
    %v573 = vadd.f32 %v500, %v570
    %v574 = vxor.u32 %v573, 2147483648
    %v575 = vmul.f32 %v574, 1.442695
    %v576 = vpow.pop %v575
    %v577 = vadd.f32 %v576, 1.0
    %v578 = vrcp.pop %v577
    %v579 = vmul.f32 1.0, %v578
    %v580 = vtanh.pop %v573
    %v581 = vmul.f32 %v579, %v486
    %583 = vrot.lane.b32.xlu0 %v580, 64
    %v584 = vpop.permute.xlu0 %583
    %v586 = vmul.f32 %v579, %v584
    %588 = vrot.lane.b32.xlu0 %v586, 32
    %v589 = vpop.permute.xlu0 %588
    %v591 = vadd.f32 %v581, %v589
    %v592 = vtanh.pop %v591
    %594 = vrot.lane.b32.xlu0 %v592, 64
    %v595 = vpop.permute.xlu0 %594
    %v597 = vmul.f32 %v579, %v595
    %599 = vrot.lane.b32.xlu0 %v597, 32
    %v600 = vpop.permute.xlu0 %599
    %s602 = scalar_lea.vmem [#allocation3], 24
    %603 = vst.msk [vmem:[%s602] sm:$0xff] %vm43, %v600
    %s604 = scalar_lea.vmem [#allocation2], 32
    %v605 = vld [vmem:[%s604] sm:$0xff]
    %v606 = vsel %vm43, %v600, 0
    %608 = vmatprep.subr.mxu0 0.0
    %609 = vmatpush1.msra.mxu0 %v181
    %610 = vmatprep.subr.mxu0 0.0
    %611 = vmatpush1.msra.mxu0 %v182
    %612 = vmatprep.subr.mxu0 0.0
    %613 = vmatpush1.msra.mxu0 %v183
    %614 = vmatprep.subr.mxu0 0.0
    %615 = vmatpush1.msra.mxu0 %v184
    %616 = vmatprep.subr.mxu0 0.0
    %617 = vmatpush1.msra.mxu0 0.0
    %618 = vmatprep.subr.mxu0 0.0
    %619 = vmatpush1.msra.mxu0 0.0
    %620 = vmatprep.subr.mxu0 0.0
    %621 = vmatpush1.msra.mxu0 0.0
    %622 = vmatprep.subr.mxu0 0.0
    %623 = vmatpush1.msra.mxu0 0.0
    %624 = vmatprep.subr.mxu0 0.0
    %625 = vmatpush1.msra.mxu0 0.0
    %626 = vmatprep.subr.mxu0 0.0
    %627 = vmatpush1.msra.mxu0 0.0
    %628 = vmatprep.subr.mxu0 0.0
    %629 = vmatpush1.msra.mxu0 0.0
    %630 = vmatprep.subr.mxu0 0.0
    %631 = vmatpush1.msra.mxu0 0.0
    %632 = vmatprep.subr.mxu0 0.0
    %633 = vmatpush1.msra.mxu0 0.0
    %634 = vmatprep.subr.mxu0 0.0
    %635 = vmatpush1.msra.mxu0 0.0
    %636 = vmatprep.subr.mxu0 0.0
    %637 = vmatpush1.msra.mxu0 0.0
    %638 = vmatprep.subr.mxu0 0.0
    %639 = vmatpush1.msra.mxu0 0.0
    %640 = vmatprep.subr.mxu0 0.0
    %641 = vmatpush1.msra.mxu0 0.0
    %642 = vmatprep.subr.mxu0 0.0
    %643 = vmatpush1.msra.mxu0 0.0
    %644 = vmatprep.subr.mxu0 0.0
    %645 = vmatpush1.msra.mxu0 0.0
    %646 = vmatprep.subr.mxu0 0.0
    %647 = vmatpush1.msra.mxu0 0.0
    %648 = vmatprep.subr.mxu0 0.0
    %649 = vmatpush1.msra.mxu0 0.0
    %650 = vmatprep.subr.mxu0 0.0
    %651 = vmatpush1.msra.mxu0 0.0
    %652 = vmatprep.subr.mxu0 0.0
    %653 = vmatpush1.msra.mxu0 0.0
    %654 = vmatprep.subr.mxu0 0.0
    %655 = vmatpush1.msra.mxu0 0.0
    %656 = vmatprep.subr.mxu0 0.0
    %657 = vmatpush1.msra.mxu0 0.0
    %658 = vmatprep.subr.mxu0 0.0
    %659 = vmatpush1.msra.mxu0 0.0
    %660 = vmatprep.subr.mxu0 0.0
    %661 = vmatpush1.msra.mxu0 0.0
    %662 = vmatprep.subr.mxu0 0.0
    %663 = vmatpush1.msra.mxu0 0.0
    %664 = vmatprep.subr.mxu0 0.0
    %665 = vmatpush1.msra.mxu0 0.0
    %666 = vmatprep.subr.mxu0 0.0
    %667 = vmatpush1.msra.mxu0 0.0
    %668 = vmatprep.subr.mxu0 0.0
    %669 = vmatpush1.msra.mxu0 0.0
    %670 = vmatprep.subr.mxu0 0.0
    %671 = vmatpush1.msra.mxu0 0.0
    %672 = vmatprep.mubr.f32.mxu0 0.0
    %673 = vmatmul.mubr.f32.gmra.mrb[0].mxu0 %v606
    %v674 = vpop.f32.mrb[0].mxu0
    %v675 = vadd.f32 0.0, %v674
    %v676 = vpop.f32.mrb[0].mxu0
    %677 = vdwg.mxu0
    %v678 = vadd.f32 %v605, %v675
    %v679 = vxor.u32 %v678, 2147483648
    %v680 = vmul.f32 %v679, 1.442695
    %v681 = vpow.pop %v680
    %v682 = vadd.f32 %v681, 1.0
    %v683 = vrcp.pop %v682
    %v684 = vmul.f32 1.0, %v683
    %v685 = vtanh.pop %v678
    %v686 = vmul.f32 %v684, %v591
    %688 = vrot.lane.b32.xlu0 %v685, 64
    %v689 = vpop.permute.xlu0 %688
    %v691 = vmul.f32 %v684, %v689
    %693 = vrot.lane.b32.xlu0 %v691, 32
    %v694 = vpop.permute.xlu0 %693
    %v696 = vadd.f32 %v686, %v694
    %v697 = vtanh.pop %v696
    %699 = vrot.lane.b32.xlu0 %v697, 64
    %v700 = vpop.permute.xlu0 %699
    %v702 = vmul.f32 %v684, %v700
    %704 = vrot.lane.b32.xlu0 %v702, 32
    %v705 = vpop.permute.xlu0 %704
    %s707 = scalar_lea.vmem [#allocation3], 32
    %708 = vst.msk [vmem:[%s707] sm:$0xff] %vm43, %v705
    %s709 = scalar_lea.vmem [#allocation2], 40
    %v710 = vld [vmem:[%s709] sm:$0xff]
    %v711 = vsel %vm43, %v705, 0
    %713 = vmatprep.subr.mxu0 0.0
    %714 = vmatpush1.msra.mxu0 %v181
    %715 = vmatprep.subr.mxu0 0.0
    %716 = vmatpush1.msra.mxu0 %v182
    %717 = vmatprep.subr.mxu0 0.0
    %718 = vmatpush1.msra.mxu0 %v183
    %719 = vmatprep.subr.mxu0 0.0
    %720 = vmatpush1.msra.mxu0 %v184
    %721 = vmatprep.subr.mxu0 0.0
    %722 = vmatpush1.msra.mxu0 0.0
    %723 = vmatprep.subr.mxu0 0.0
    %724 = vmatpush1.msra.mxu0 0.0
    %725 = vmatprep.subr.mxu0 0.0
    %726 = vmatpush1.msra.mxu0 0.0
    %727 = vmatprep.subr.mxu0 0.0
    %728 = vmatpush1.msra.mxu0 0.0
    %729 = vmatprep.subr.mxu0 0.0
    %730 = vmatpush1.msra.mxu0 0.0
    %731 = vmatprep.subr.mxu0 0.0
    %732 = vmatpush1.msra.mxu0 0.0
    %733 = vmatprep.subr.mxu0 0.0
    %734 = vmatpush1.msra.mxu0 0.0
    %735 = vmatprep.subr.mxu0 0.0
    %736 = vmatpush1.msra.mxu0 0.0
    %737 = vmatprep.subr.mxu0 0.0
    %738 = vmatpush1.msra.mxu0 0.0
    %739 = vmatprep.subr.mxu0 0.0
    %740 = vmatpush1.msra.mxu0 0.0
    %741 = vmatprep.subr.mxu0 0.0
    %742 = vmatpush1.msra.mxu0 0.0
    %743 = vmatprep.subr.mxu0 0.0
    %744 = vmatpush1.msra.mxu0 0.0
    %745 = vmatprep.subr.mxu0 0.0
    %746 = vmatpush1.msra.mxu0 0.0
    %747 = vmatprep.subr.mxu0 0.0
    %748 = vmatpush1.msra.mxu0 0.0
    %749 = vmatprep.subr.mxu0 0.0
    %750 = vmatpush1.msra.mxu0 0.0
    %751 = vmatprep.subr.mxu0 0.0
    %752 = vmatpush1.msra.mxu0 0.0
    %753 = vmatprep.subr.mxu0 0.0
    %754 = vmatpush1.msra.mxu0 0.0
    %755 = vmatprep.subr.mxu0 0.0
    %756 = vmatpush1.msra.mxu0 0.0
    %757 = vmatprep.subr.mxu0 0.0
    %758 = vmatpush1.msra.mxu0 0.0
    %759 = vmatprep.subr.mxu0 0.0
    %760 = vmatpush1.msra.mxu0 0.0
    %761 = vmatprep.subr.mxu0 0.0
    %762 = vmatpush1.msra.mxu0 0.0
    %763 = vmatprep.subr.mxu0 0.0
    %764 = vmatpush1.msra.mxu0 0.0
    %765 = vmatprep.subr.mxu0 0.0
    %766 = vmatpush1.msra.mxu0 0.0
    %767 = vmatprep.subr.mxu0 0.0
    %768 = vmatpush1.msra.mxu0 0.0
    %769 = vmatprep.subr.mxu0 0.0
    %770 = vmatpush1.msra.mxu0 0.0
    %771 = vmatprep.subr.mxu0 0.0
    %772 = vmatpush1.msra.mxu0 0.0
    %773 = vmatprep.subr.mxu0 0.0
    %774 = vmatpush1.msra.mxu0 0.0
    %775 = vmatprep.subr.mxu0 0.0
    %776 = vmatpush1.msra.mxu0 0.0
    %777 = vmatprep.mubr.f32.mxu0 0.0
    %778 = vmatmul.mubr.f32.gmra.mrb[0].mxu0 %v711
    %v779 = vpop.f32.mrb[0].mxu0
    %v780 = vadd.f32 0.0, %v779
    %v781 = vpop.f32.mrb[0].mxu0
    %782 = vdwg.mxu0
    %v783 = vadd.f32 %v710, %v780
    %v784 = vxor.u32 %v783, 2147483648
    %v785 = vmul.f32 %v784, 1.442695
    %v786 = vpow.pop %v785
    %v787 = vadd.f32 %v786, 1.0
    %v788 = vrcp.pop %v787
    %v789 = vmul.f32 1.0, %v788
    %v790 = vtanh.pop %v783
    %v791 = vmul.f32 %v789, %v696
    %793 = vrot.lane.b32.xlu0 %v790, 64
    %v794 = vpop.permute.xlu0 %793
    %v796 = vmul.f32 %v789, %v794
    %798 = vrot.lane.b32.xlu0 %v796, 32
    %v799 = vpop.permute.xlu0 %798
    %v801 = vadd.f32 %v791, %v799
    %v802 = vtanh.pop %v801
    %804 = vrot.lane.b32.xlu0 %v802, 64
    %v805 = vpop.permute.xlu0 %804
    %v807 = vmul.f32 %v789, %v805
    %809 = vrot.lane.b32.xlu0 %v807, 32
    %v810 = vpop.permute.xlu0 %809
    %s812 = scalar_lea.vmem [#allocation3], 40
    %813 = vst.msk [vmem:[%s812] sm:$0xff] %vm43, %v810
    %s814 = scalar_lea.vmem [#allocation2], 48
    %v815 = vld [vmem:[%s814] sm:$0xff]
    %v816 = vsel %vm43, %v810, 0
    %818 = vmatprep.subr.mxu0 0.0
    %819 = vmatpush1.msra.mxu0 %v181
    %820 = vmatprep.subr.mxu0 0.0
    %821 = vmatpush1.msra.mxu0 %v182
    %822 = vmatprep.subr.mxu0 0.0
    %823 = vmatpush1.msra.mxu0 %v183
    %824 = vmatprep.subr.mxu0 0.0
    %825 = vmatpush1.msra.mxu0 %v184
    %826 = vmatprep.subr.mxu0 0.0
    %827 = vmatpush1.msra.mxu0 0.0
    %828 = vmatprep.subr.mxu0 0.0
    %829 = vmatpush1.msra.mxu0 0.0
    %830 = vmatprep.subr.mxu0 0.0
    %831 = vmatpush1.msra.mxu0 0.0
    %832 = vmatprep.subr.mxu0 0.0
    %833 = vmatpush1.msra.mxu0 0.0
    %834 = vmatprep.subr.mxu0 0.0
    %835 = vmatpush1.msra.mxu0 0.0
    %836 = vmatprep.subr.mxu0 0.0
    %837 = vmatpush1.msra.mxu0 0.0
    %838 = vmatprep.subr.mxu0 0.0
    %839 = vmatpush1.msra.mxu0 0.0
    %840 = vmatprep.subr.mxu0 0.0
    %841 = vmatpush1.msra.mxu0 0.0
    %842 = vmatprep.subr.mxu0 0.0
    %843 = vmatpush1.msra.mxu0 0.0
    %844 = vmatprep.subr.mxu0 0.0
    %845 = vmatpush1.msra.mxu0 0.0
    %846 = vmatprep.subr.mxu0 0.0
    %847 = vmatpush1.msra.mxu0 0.0
    %848 = vmatprep.subr.mxu0 0.0
    %849 = vmatpush1.msra.mxu0 0.0
    %850 = vmatprep.subr.mxu0 0.0
    %851 = vmatpush1.msra.mxu0 0.0
    %852 = vmatprep.subr.mxu0 0.0
    %853 = vmatpush1.msra.mxu0 0.0
    %854 = vmatprep.subr.mxu0 0.0
    %855 = vmatpush1.msra.mxu0 0.0
    %856 = vmatprep.subr.mxu0 0.0
    %857 = vmatpush1.msra.mxu0 0.0
    %858 = vmatprep.subr.mxu0 0.0
    %859 = vmatpush1.msra.mxu0 0.0
    %860 = vmatprep.subr.mxu0 0.0
    %861 = vmatpush1.msra.mxu0 0.0
    %862 = vmatprep.subr.mxu0 0.0
    %863 = vmatpush1.msra.mxu0 0.0
    %864 = vmatprep.subr.mxu0 0.0
    %865 = vmatpush1.msra.mxu0 0.0
    %866 = vmatprep.subr.mxu0 0.0
    %867 = vmatpush1.msra.mxu0 0.0
    %868 = vmatprep.subr.mxu0 0.0
    %869 = vmatpush1.msra.mxu0 0.0
    %870 = vmatprep.subr.mxu0 0.0
    %871 = vmatpush1.msra.mxu0 0.0
    %872 = vmatprep.subr.mxu0 0.0
    %873 = vmatpush1.msra.mxu0 0.0
    %874 = vmatprep.subr.mxu0 0.0
    %875 = vmatpush1.msra.mxu0 0.0
    %876 = vmatprep.subr.mxu0 0.0
    %877 = vmatpush1.msra.mxu0 0.0
    %878 = vmatprep.subr.mxu0 0.0
    %879 = vmatpush1.msra.mxu0 0.0
    %880 = vmatprep.subr.mxu0 0.0
    %881 = vmatpush1.msra.mxu0 0.0
    %882 = vmatprep.mubr.f32.mxu0 0.0
    %883 = vmatmul.mubr.f32.gmra.mrb[0].mxu0 %v816
    %v884 = vpop.f32.mrb[0].mxu0
    %v885 = vadd.f32 0.0, %v884
    %v886 = vpop.f32.mrb[0].mxu0
    %887 = vdwg.mxu0
    %v888 = vadd.f32 %v815, %v885
    %v889 = vxor.u32 %v888, 2147483648
    %v890 = vmul.f32 %v889, 1.442695
    %v891 = vpow.pop %v890
    %v892 = vadd.f32 %v891, 1.0
    %v893 = vrcp.pop %v892
    %v894 = vmul.f32 1.0, %v893
    %v895 = vtanh.pop %v888
    %v896 = vmul.f32 %v894, %v801
    %898 = vrot.lane.b32.xlu0 %v895, 64
    %v899 = vpop.permute.xlu0 %898
    %v901 = vmul.f32 %v894, %v899
    %903 = vrot.lane.b32.xlu0 %v901, 32
    %v904 = vpop.permute.xlu0 %903
    %v906 = vadd.f32 %v896, %v904
    %v907 = vtanh.pop %v906
    %909 = vrot.lane.b32.xlu0 %v907, 64
    %v910 = vpop.permute.xlu0 %909
    %v912 = vmul.f32 %v894, %v910
    %914 = vrot.lane.b32.xlu0 %v912, 32
    %v915 = vpop.permute.xlu0 %914
    %s917 = scalar_lea.vmem [#allocation3], 48
    %918 = vst.msk [vmem:[%s917] sm:$0xff] %vm43, %v915
    %s919 = scalar_lea.vmem [#allocation2], 56
    %v920 = vld [vmem:[%s919] sm:$0xff]
    %v921 = vsel %vm43, %v915, 0
    %923 = vmatprep.subr.mxu0 0.0
    %924 = vmatpush1.msra.mxu0 %v181
    %925 = vmatprep.subr.mxu0 0.0
    %926 = vmatpush1.msra.mxu0 %v182
    %927 = vmatprep.subr.mxu0 0.0
    %928 = vmatpush1.msra.mxu0 %v183
    %929 = vmatprep.subr.mxu0 0.0
    %930 = vmatpush1.msra.mxu0 %v184
    %931 = vmatprep.subr.mxu0 0.0
    %932 = vmatpush1.msra.mxu0 0.0
    %933 = vmatprep.subr.mxu0 0.0
    %934 = vmatpush1.msra.mxu0 0.0
    %935 = vmatprep.subr.mxu0 0.0
    %936 = vmatpush1.msra.mxu0 0.0
    %937 = vmatprep.subr.mxu0 0.0
    %938 = vmatpush1.msra.mxu0 0.0
    %939 = vmatprep.subr.mxu0 0.0
    %940 = vmatpush1.msra.mxu0 0.0
    %941 = vmatprep.subr.mxu0 0.0
    %942 = vmatpush1.msra.mxu0 0.0
    %943 = vmatprep.subr.mxu0 0.0
    %944 = vmatpush1.msra.mxu0 0.0
    %945 = vmatprep.subr.mxu0 0.0
    %946 = vmatpush1.msra.mxu0 0.0
    %947 = vmatprep.subr.mxu0 0.0
    %948 = vmatpush1.msra.mxu0 0.0
    %949 = vmatprep.subr.mxu0 0.0
    %950 = vmatpush1.msra.mxu0 0.0
    %951 = vmatprep.subr.mxu0 0.0
    %952 = vmatpush1.msra.mxu0 0.0
    %953 = vmatprep.subr.mxu0 0.0
    %954 = vmatpush1.msra.mxu0 0.0
    %955 = vmatprep.subr.mxu0 0.0
    %956 = vmatpush1.msra.mxu0 0.0
    %957 = vmatprep.subr.mxu0 0.0
    %958 = vmatpush1.msra.mxu0 0.0
    %959 = vmatprep.subr.mxu0 0.0
    %960 = vmatpush1.msra.mxu0 0.0
    %961 = vmatprep.subr.mxu0 0.0
    %962 = vmatpush1.msra.mxu0 0.0
    %963 = vmatprep.subr.mxu0 0.0
    %964 = vmatpush1.msra.mxu0 0.0
    %965 = vmatprep.subr.mxu0 0.0
    %966 = vmatpush1.msra.mxu0 0.0
    %967 = vmatprep.subr.mxu0 0.0
    %968 = vmatpush1.msra.mxu0 0.0
    %969 = vmatprep.subr.mxu0 0.0
    %970 = vmatpush1.msra.mxu0 0.0
    %971 = vmatprep.subr.mxu0 0.0
    %972 = vmatpush1.msra.mxu0 0.0
    %973 = vmatprep.subr.mxu0 0.0
    %974 = vmatpush1.msra.mxu0 0.0
    %975 = vmatprep.subr.mxu0 0.0
    %976 = vmatpush1.msra.mxu0 0.0
    %977 = vmatprep.subr.mxu0 0.0
    %978 = vmatpush1.msra.mxu0 0.0
    %979 = vmatprep.subr.mxu0 0.0
    %980 = vmatpush1.msra.mxu0 0.0
    %981 = vmatprep.subr.mxu0 0.0
    %982 = vmatpush1.msra.mxu0 0.0
    %983 = vmatprep.subr.mxu0 0.0
    %984 = vmatpush1.msra.mxu0 0.0
    %985 = vmatprep.subr.mxu0 0.0
    %986 = vmatpush1.msra.mxu0 0.0
    %987 = vmatprep.mubr.f32.mxu0 0.0
    %988 = vmatmul.mubr.f32.gmra.mrb[0].mxu0 %v921
    %v989 = vpop.f32.mrb[0].mxu0
    %v990 = vadd.f32 0.0, %v989
    %v991 = vpop.f32.mrb[0].mxu0
    %992 = vdwg.mxu0
    %v993 = vadd.f32 %v920, %v990
    %v994 = vxor.u32 %v993, 2147483648
    %v995 = vmul.f32 %v994, 1.442695
    %v996 = vpow.pop %v995
    %v997 = vadd.f32 %v996, 1.0
    %v998 = vrcp.pop %v997
    %v999 = vmul.f32 1.0, %v998
    %v1000 = vtanh.pop %v993
    %v1001 = vmul.f32 %v999, %v906
    %1003 = vrot.lane.b32.xlu0 %v1000, 64
    %v1004 = vpop.permute.xlu0 %1003
    %v1006 = vmul.f32 %v999, %v1004
    %1008 = vrot.lane.b32.xlu0 %v1006, 32
    %v1009 = vpop.permute.xlu0 %1008
    %v1011 = vadd.f32 %v1001, %v1009
    %v1012 = vtanh.pop %v1011
    %1014 = vrot.lane.b32.xlu0 %v1012, 64
    %v1015 = vpop.permute.xlu0 %1014
    %v1017 = vmul.f32 %v999, %v1015
    %1019 = vrot.lane.b32.xlu0 %v1017, 32
    %v1020 = vpop.permute.xlu0 %1019
    %s1022 = scalar_lea.vmem [#allocation3], 56
    %1023 = vst.msk [vmem:[%s1022] sm:$0xff] %vm43, %v1020
    %v1024 = vld [vmem:[#allocation3] sm:$0xff]
    %v1025 = vld [vmem:[#allocation3 + $0x8] sm:$0xff]
    %v1026 = vld [vmem:[#allocation3 + $0x10] sm:$0xff]
    %v1027 = vld [vmem:[#allocation3 + $0x18] sm:$0xff]
    %v1028 = vld [vmem:[#allocation3 + $0x20] sm:$0xff]
    %v1029 = vld [vmem:[#allocation3 + $0x28] sm:$0xff]
    %v1030 = vld [vmem:[#allocation3 + $0x30] sm:$0xff]
    %v1031 = vld [vmem:[#allocation3 + $0x38] sm:$0xff]
    %v1032 = vld [vmem:[%s4] sm:$0xff]
    %v1033 = vld [vmem:[%s4 + $0x8] sm:$0xff]
    %v1034 = vld [vmem:[%s4 + $0x10] sm:$0xff]
    %v1035 = vld [vmem:[%s4 + $0x18] sm:$0xff]
    %v1036 = vld [vmem:[%s5] sm:$0x1]
    %v1038 = vlaneseq
    %v1039 = vshrl.u32 %v1038, 7
    %v1040 = vsub.s32 0, %v1039
    %v1041 = vrot.slane %v1036, %v1040
    %v1044 = vsel %vm43, %v1024, 0
    %v1047 = vsel %vm43, %v1025, 0
    %v1050 = vsel %vm43, %v1026, 0
    %v1053 = vsel %vm43, %v1027, 0
    %v1056 = vsel %vm43, %v1028, 0
    %v1059 = vsel %vm43, %v1029, 0
    %v1062 = vsel %vm43, %v1030, 0
    %v1065 = vsel %vm43, %v1031, 0
    %1067 = vmatprep.subr.mxu0 0.0
    %1068 = vmatpush1.msra.mxu0 %v1032
    %1069 = vmatprep.subr.mxu0 0.0
    %1070 = vmatpush1.msra.mxu0 %v1033
    %1071 = vmatprep.subr.mxu0 0.0
    %1072 = vmatpush1.msra.mxu0 %v1034
    %1073 = vmatprep.subr.mxu0 0.0
    %1074 = vmatpush1.msra.mxu0 %v1035
    %1075 = vmatprep.subr.mxu0 0.0
    %1076 = vmatpush1.msra.mxu0 0.0
    %1077 = vmatprep.subr.mxu0 0.0
    %1078 = vmatpush1.msra.mxu0 0.0
    %1079 = vmatprep.subr.mxu0 0.0
    %1080 = vmatpush1.msra.mxu0 0.0
    %1081 = vmatprep.subr.mxu0 0.0
    %1082 = vmatpush1.msra.mxu0 0.0
    %1083 = vmatprep.subr.mxu0 0.0
    %1084 = vmatpush1.msra.mxu0 0.0
    %1085 = vmatprep.subr.mxu0 0.0
    %1086 = vmatpush1.msra.mxu0 0.0
    %1087 = vmatprep.subr.mxu0 0.0
    %1088 = vmatpush1.msra.mxu0 0.0
    %1089 = vmatprep.subr.mxu0 0.0
    %1090 = vmatpush1.msra.mxu0 0.0
    %1091 = vmatprep.subr.mxu0 0.0
    %1092 = vmatpush1.msra.mxu0 0.0
    %1093 = vmatprep.subr.mxu0 0.0
    %1094 = vmatpush1.msra.mxu0 0.0
    %1095 = vmatprep.subr.mxu0 0.0
    %1096 = vmatpush1.msra.mxu0 0.0
    %1097 = vmatprep.subr.mxu0 0.0
    %1098 = vmatpush1.msra.mxu0 0.0
    %1099 = vmatprep.subr.mxu0 0.0
    %1100 = vmatpush1.msra.mxu0 0.0
    %1101 = vmatprep.subr.mxu0 0.0
    %1102 = vmatpush1.msra.mxu0 0.0
    %1103 = vmatprep.subr.mxu0 0.0
    %1104 = vmatpush1.msra.mxu0 0.0
    %1105 = vmatprep.subr.mxu0 0.0
    %1106 = vmatpush1.msra.mxu0 0.0
    %1107 = vmatprep.subr.mxu0 0.0
    %1108 = vmatpush1.msra.mxu0 0.0
    %1109 = vmatprep.subr.mxu0 0.0
    %1110 = vmatpush1.msra.mxu0 0.0
    %1111 = vmatprep.subr.mxu0 0.0
    %1112 = vmatpush1.msra.mxu0 0.0
    %1113 = vmatprep.subr.mxu0 0.0
    %1114 = vmatpush1.msra.mxu0 0.0
    %1115 = vmatprep.subr.mxu0 0.0
    %1116 = vmatpush1.msra.mxu0 0.0
    %1117 = vmatprep.subr.mxu0 0.0
    %1118 = vmatpush1.msra.mxu0 0.0
    %1119 = vmatprep.subr.mxu0 0.0
    %1120 = vmatpush1.msra.mxu0 0.0
    %1121 = vmatprep.subr.mxu0 0.0
    %1122 = vmatpush1.msra.mxu0 0.0
    %1123 = vmatprep.subr.mxu0 0.0
    %1124 = vmatpush1.msra.mxu0 0.0
    %1125 = vmatprep.subr.mxu0 0.0
    %1126 = vmatpush1.msra.mxu0 0.0
    %1127 = vmatprep.subr.mxu0 0.0
    %1128 = vmatpush1.msra.mxu0 0.0
    %1129 = vmatprep.subr.mxu0 0.0
    %1130 = vmatpush1.msra.mxu0 0.0
    %1131 = vmatprep.mubr.f32.mxu0 0.0
    %1132 = vmatmul.mubr.f32.gmra.mrb[0].mxu0 %v1044
    %v1133 = vpop.f32.mrb[0].mxu0
    %v1134 = vadd.f32 %v1041, %v1133
    %v1135 = vpop.f32.mrb[0].mxu0
    %1136 = vmatprep.mubr.f32.mxu0 0.0
    %1137 = vmatmul.mubr.f32.gmra.mrb[0].mxu0 %v1047
    %v1138 = vpop.f32.mrb[0].mxu0
    %v1139 = vadd.f32 %v1041, %v1138
    %v1140 = vpop.f32.mrb[0].mxu0
    %1141 = vmatprep.mubr.f32.mxu0 0.0
    %1142 = vmatmul.mubr.f32.gmra.mrb[0].mxu0 %v1050
    %v1143 = vpop.f32.mrb[0].mxu0
    %v1144 = vadd.f32 %v1041, %v1143
    %v1145 = vpop.f32.mrb[0].mxu0
    %1146 = vmatprep.mubr.f32.mxu0 0.0
    %1147 = vmatmul.mubr.f32.gmra.mrb[0].mxu0 %v1053
    %v1148 = vpop.f32.mrb[0].mxu0
    %v1149 = vadd.f32 %v1041, %v1148
    %v1150 = vpop.f32.mrb[0].mxu0
    %1151 = vmatprep.mubr.f32.mxu0 0.0
    %1152 = vmatmul.mubr.f32.gmra.mrb[0].mxu0 %v1056
    %v1153 = vpop.f32.mrb[0].mxu0
    %v1154 = vadd.f32 %v1041, %v1153
    %v1155 = vpop.f32.mrb[0].mxu0
    %1156 = vmatprep.mubr.f32.mxu0 0.0
    %1157 = vmatmul.mubr.f32.gmra.mrb[0].mxu0 %v1059
    %v1158 = vpop.f32.mrb[0].mxu0
    %v1159 = vadd.f32 %v1041, %v1158
    %v1160 = vpop.f32.mrb[0].mxu0
    %1161 = vmatprep.mubr.f32.mxu0 0.0
    %1162 = vmatmul.mubr.f32.gmra.mrb[0].mxu0 %v1062
    %v1163 = vpop.f32.mrb[0].mxu0
    %v1164 = vadd.f32 %v1041, %v1163
    %v1165 = vpop.f32.mrb[0].mxu0
    %1166 = vmatprep.mubr.f32.mxu0 0.0
    %1167 = vmatmul.mubr.f32.gmra.mrb[0].mxu0 %v1065
    %v1168 = vpop.f32.mrb[0].mxu0
    %v1169 = vadd.f32 %v1041, %v1168
    %v1170 = vpop.f32.mrb[0].mxu0
    %1171 = vdwg.mxu0
    %1172 = vst [vmem:[#allocation4] sm:$0xff] %v1134
    %1173 = vst [vmem:[#allocation4 + $0x8] sm:$0xff] %v1139
    %1174 = vst [vmem:[#allocation4 + $0x10] sm:$0xff] %v1144
    %1175 = vst [vmem:[#allocation4 + $0x18] sm:$0xff] %v1149
    %1176 = vst [vmem:[#allocation4 + $0x20] sm:$0xff] %v1154
    %1177 = vst [vmem:[#allocation4 + $0x28] sm:$0xff] %v1159
    %1178 = vst [vmem:[#allocation4 + $0x30] sm:$0xff] %v1164
    %1179 = vst [vmem:[#allocation4 + $0x38] sm:$0xff] %v1169
    // Predicated region
    $region26: #{tpu_custom_call.1} parent=1 // pred_check
      _
    $region27: #{tpu_custom_call.1} parent=1 // pred_check_branch
      %1181 = sbr.rel (0) target = $region29
    $region28: #{tpu_custom_call.1} parent=1 // pred_region
      %s1183 = ssub.s32 1024, 1024
      %1184 = vsyncadd [#allocation5], %s1183
      %s1185 = sshll.u32 [#allocation4], 4
      %s1186 = int_to_ptr.vmem [resolvable:$true] %s1185
      %1191 = dma.vmem_to_hbm [thread:$0]  %s1186, 1024, %s6, [#allocation5], 128, 128, 8
    $region29: #{tpu_custom_call.1} parent=1 // pred_fallthru
      _
    // Predicated region
    $region30: #{tpu_custom_call.1} parent=1 // pred_check
      _
    $region31: #{tpu_custom_call.1} parent=1 // pred_check_branch
      %1193 = sbr.rel (0) target = $region33
    $region32: #{tpu_custom_call.1} parent=1 // pred_region
      %1194 = dma.done [#allocation5], 1024
    $region33: #{tpu_custom_call.1} parent=1 // pred_fallthru
      _
    %1195 = vsyncpa [#allocation5], 1

</llo_original>
